<compile_context>
chip_gen: v5e
topology: v5e:2x2
jax: 0.10.0
libtpu: 0.0.40
codegen_flags: <defaults>
</compile_context>

<pallas_src>
import jax
import jax.numpy as jnp
from jax.experimental import pallas as pl
from jax.experimental.pallas import tpu as pltpu


def _disc_kernel(x_ref, w1_ref, b1_ref, w2_ref, b2_ref, w3_ref, b3_ref, o_ref):
    """Fused 3-layer MLP forward for one batch tile."""
    # Cast f32 -> bf16 in-kernel (free VPU work hidden under the MXU).
    x = x_ref[...].astype(jnp.bfloat16)                               # (TB, D)

    # Layer 1: bf16 x bf16 on the MXU, f32 accumulate, f32 LeakyReLU on VPU.
    h1 = jnp.dot(x, w1_ref[...], preferred_element_type=jnp.float32)
    h1 = h1 + b1_ref[...]                                             # (TB, 512)
    h1 = jnp.where(h1 > 0, h1, 0.2 * h1)

    # Layer 2.
    h2 = jnp.dot(h1.astype(jnp.bfloat16), w2_ref[...],
                 preferred_element_type=jnp.float32)
    h2 = h2 + b2_ref[...]                                             # (TB, 256)
    h2 = jnp.where(h2 > 0, h2, 0.2 * h2)

    # Layer 3 (256 -> 1): VPU multiply + cross-lane (XLU) reduction instead
    # of an N=1 matmul that would use 1/256 of the MXU.  b3 scalar from SMEM.
    out = jnp.sum(h2 * w3_ref[...], axis=-1, keepdims=True) + b3_ref[0]
    o_ref[...] = out.astype(o_ref.dtype)                              # (TB, 1)


def _pick_batch_tile(B):
    """Batch tile selection.

    Large tiles amortize per-grid-step overhead, but batches > 128 are split
    into >=2 steps so dimension_semantics=("parallel",) can shard the grid
    across v7x's two TensorCores.  Tiles stay multiples of 128 (full MXU
    rows) unless the whole batch fits in one sub-128 block."""
    if B <= 128:
        return B
    desired = 512
    half = -(-B // 2)                      # cdiv(B, 2)
    half_aligned = -(-half // 128) * 128   # round up to a multiple of 128
    return min(desired, half_aligned)


def prepare_params(params):
    """One-time (outside jit) conversion: bf16 master weights for the MXU,
    f32 biases / final-layer row, scalar b3 for SMEM."""
    w1, b1, w2, b2, w3, b3 = params
    return (
        w1.astype(jnp.bfloat16),                 # (D, 512)
        b1.reshape(1, 512).astype(jnp.float32),  # (1, 512)
        w2.astype(jnp.bfloat16),                 # (512, 256)
        b2.reshape(1, 256).astype(jnp.float32),  # (1, 256)
        w3.reshape(1, 256).astype(jnp.float32),  # (1, 256) used on the VPU
        b3.reshape(1).astype(jnp.float32),       # scalar -> SMEM
    )


@jax.jit
def discriminator_forward(img, prepared_params):
    """img: (B, C, H, W) float32.  Returns validity logits of shape (B, 1)."""
    w1b, b1, w2b, b2, w3_row, b3_s = prepared_params
    B = img.shape[0]
    D = w1b.shape[0]

    # Flatten exactly like torch's img.view(B, -1) on an NCHW tensor.
    # NOTE: no bf16 cast here -- the kernel casts in-VMEM.
    x = img.reshape(B, D)

    TB = _pick_batch_tile(B)
    num_steps = pl.cdiv(B, TB)
    grid = (num_steps,)

    # Tight VMEM budget from the actual working set (+50% headroom),
    # clamped to [16 MiB, 32 MiB] -- safe on v5e/v6e (128 MiB) and v7x (64 MiB).
    working_set = (
        2 * TB * D * 4                    # double-buffered f32 x tile
        + D * 512 * 2 + 512 * 256 * 2     # resident bf16 weights
        + (512 + 256 + 256) * 4 * 2       # biases / w3 row (padded tiles)
        + TB * (512 + 256) * 4            # h1 / h2 intermediates
        + 2 * TB * 128 * 4                # (lane-padded) output tile
    )
    vmem_limit = int(min(32 << 20, max(16 << 20, (3 * working_set) // 2)))

    cost = pl.CostEstimate(
        flops=2 * B * (D * 512 + 512 * 256 + 256),
        transcendentals=0,
        bytes_accessed=(B * D * 4 + D * 512 * 2 + 512 * 4
                        + 512 * 256 * 2 + 256 * 4 + 256 * 4 + 4 + B * 4),
    )

    out = pl.pallas_call(
        _disc_kernel,
        out_shape=jax.ShapeDtypeStruct((B, 1), jnp.float32),
        grid=grid,
        in_specs=[
            pl.BlockSpec((TB, D), lambda i: (i, 0)),        # x tile (f32)
            pl.BlockSpec((D, 512), lambda i: (0, 0)),       # w1 (resident, bf16)
            pl.BlockSpec((1, 512), lambda i: (0, 0)),       # b1 (f32)
            pl.BlockSpec((512, 256), lambda i: (0, 0)),     # w2 (resident, bf16)
            pl.BlockSpec((1, 256), lambda i: (0, 0)),       # b2 (f32)
            pl.BlockSpec((1, 256), lambda i: (0, 0)),       # w3 row (f32)
            pl.BlockSpec(memory_space=pltpu.MemorySpace.SMEM),  # b3 scalar
        ],
        out_specs=pl.BlockSpec((TB, 1), lambda i: (i, 0)),
        compiler_params=pltpu.CompilerParams(
            dimension_semantics=("parallel",),
            vmem_limit_bytes=vmem_limit,
        ),
        cost_estimate=cost,
    )(x, w1b, b1, w2b, b2, w3_row, b3_s)

    return out


def init_params(key, in_features):
    """Deterministic init mimicking nn.Linear's U(-1/sqrt(fan_in), 1/sqrt(fan_in)).

    Weights are stored transposed vs nn.Linear, i.e. (in_features, out_features)."""
    dims = [(in_features, 512), (512, 256), (256, 1)]
    params = []
    for (fan_in, fan_out) in dims:
        key, kw, kb = jax.random.split(key, 3)
        bound = 1.0 / jnp.sqrt(float(fan_in))
        w = jax.random.uniform(kw, (fan_in, fan_out), jnp.float32, -bound, bound)
        b = jax.random.uniform(kb, (1, fan_out), jnp.float32, -bound, bound)
        params += [w, b]
    return tuple(params)


def _reference_forward(img, params):
    """Plain-JAX reference matching the module semantics (with the same bf16
    input/weight quantization the kernel uses, f32 accumulation)."""
    w1, b1, w2, b2, w3, b3 = params
    x = img.reshape(img.shape[0], -1).astype(jnp.bfloat16)
    h = jnp.dot(x, w1.astype(jnp.bfloat16),
                preferred_element_type=jnp.float32) + b1
    h = jnp.where(h > 0, h, 0.2 * h)
    h = jnp.dot(h.astype(jnp.bfloat16), w2.astype(jnp.bfloat16),
                preferred_element_type=jnp.float32) + b2
    h = jnp.where(h > 0, h, 0.2 * h)
    return h @ w3 + b3


if __name__ == "__main__":
    key = jax.random.PRNGKey(0)
    k_img, k_par = jax.random.split(key)

    # Small shapes consistent with the module: img_shape = (4, 16, 16) -> D = 1024.
    B, C, H, W = 2, 4, 16, 16
    img = jax.random.normal(k_img, (B, C, H, W), jnp.float32)

    params = init_params(k_par, C * H * W)
    prepared = prepare_params(params)   # bf16 master weights, cast once

    validity = discriminator_forward(img, prepared)
    jax.block_until_ready(validity)

    ref = _reference_forward(img, params)
    assert validity.shape == (B, 1), validity.shape
    assert jnp.allclose(validity, ref, atol=5e-3, rtol=5e-3), (
        "mismatch vs reference"
    )

    print("KERNEL_OK")
</pallas_src>

<mosaic_0001>
module attributes {stable_mosaic.version = 11 : i64} {
  func.func @_disc_kernel(%arg0: i32, %arg1: memref<2x1024xf32, #tpu.memory_space<vmem>>, %arg2: memref<1024x512xbf16, #tpu.memory_space<vmem>>, %arg3: memref<1x512xf32, #tpu.memory_space<vmem>>, %arg4: memref<512x256xbf16, #tpu.memory_space<vmem>>, %arg5: memref<1x256xf32, #tpu.memory_space<vmem>>, %arg6: memref<1x256xf32, #tpu.memory_space<vmem>>, %arg7: memref<1xf32, #tpu.memory_space<smem>>, %arg8: memref<2x1xf32, #tpu.memory_space<vmem>>) attributes {dimension_semantics = [#tpu.dimension_semantics<parallel>], iteration_bounds = array<i64: 1>, scalar_prefetch = 0 : i64, scratch_operands = 0 : i64, tpu.core_type = #tpu.core_type<tc>, window_params = [{transform_indices = @transform_0, window_bounds = array<i64: 2, 1024>}, {pipeline_mode = #tpu.pipeline_mode<synchronous>, transform_indices = @transform_1, window_bounds = array<i64: 1024, 512>}, {pipeline_mode = #tpu.pipeline_mode<synchronous>, transform_indices = @transform_2, window_bounds = array<i64: 1, 512>}, {pipeline_mode = #tpu.pipeline_mode<synchronous>, transform_indices = @transform_3, window_bounds = array<i64: 512, 256>}, {pipeline_mode = #tpu.pipeline_mode<synchronous>, transform_indices = @transform_4, window_bounds = array<i64: 1, 256>}, {pipeline_mode = #tpu.pipeline_mode<synchronous>, transform_indices = @transform_5, window_bounds = array<i64: 1, 256>}, {transform_indices = @transform_6, window_bounds = array<i64: 1>}, {transform_indices = @transform_7, window_bounds = array<i64: 2, 1>}]} {
    %c0 = arith.constant 0 : index
    %c0_0 = arith.constant 0 : index
    %0 = vector.load %arg1[%c0, %c0_0] : memref<2x1024xf32, #tpu.memory_space<vmem>>, vector<2x1024xf32>
    %1 = arith.truncf %0 : vector<2x1024xf32> to vector<2x1024xbf16>
    %c0_1 = arith.constant 0 : index
    %c0_2 = arith.constant 0 : index
    %2 = vector.load %arg2[%c0_1, %c0_2] : memref<1024x512xbf16, #tpu.memory_space<vmem>>, vector<1024x512xbf16>
    %cst = arith.constant dense<0.000000e+00> : vector<2x512xf32>
    %3 = tpu.matmul %1, %2, %cst {dimension_numbers = #tpu.dot_dimension_numbers<[1], [0], [0], [1], [0, 0, 1, 1], [], []>} : vector<2x1024xbf16>, vector<1024x512xbf16>, vector<2x512xf32> -> vector<2x512xf32>
    %c0_3 = arith.constant 0 : index
    %c0_4 = arith.constant 0 : index
    %4 = vector.load %arg3[%c0_3, %c0_4] : memref<1x512xf32, #tpu.memory_space<vmem>>, vector<1x512xf32>
    %5 = vector.broadcast %4 : vector<1x512xf32> to vector<2x512xf32>
    %6 = arith.addf %3, %5 : vector<2x512xf32>
    %cst_5 = arith.constant 0.000000e+00 : f32
    %7 = vector.broadcast %cst_5 : f32 to vector<2x512xf32>
    %8 = arith.cmpf ogt, %6, %7 : vector<2x512xf32>
    %cst_6 = arith.constant 2.000000e-01 : f32
    %9 = vector.broadcast %cst_6 : f32 to vector<2x512xf32>
    %10 = arith.mulf %9, %6 : vector<2x512xf32>
    %11 = arith.select %8, %6, %10 : vector<2x512xi1>, vector<2x512xf32>
    %12 = arith.truncf %11 : vector<2x512xf32> to vector<2x512xbf16>
    %c0_7 = arith.constant 0 : index
    %c0_8 = arith.constant 0 : index
    %13 = vector.load %arg4[%c0_7, %c0_8] : memref<512x256xbf16, #tpu.memory_space<vmem>>, vector<512x256xbf16>
    %cst_9 = arith.constant dense<0.000000e+00> : vector<2x256xf32>
    %14 = tpu.matmul %12, %13, %cst_9 {dimension_numbers = #tpu.dot_dimension_numbers<[1], [0], [0], [1], [0, 0, 1, 1], [], []>} : vector<2x512xbf16>, vector<512x256xbf16>, vector<2x256xf32> -> vector<2x256xf32>
    %c0_10 = arith.constant 0 : index
    %c0_11 = arith.constant 0 : index
    %15 = vector.load %arg5[%c0_10, %c0_11] : memref<1x256xf32, #tpu.memory_space<vmem>>, vector<1x256xf32>
    %16 = vector.broadcast %15 : vector<1x256xf32> to vector<2x256xf32>
    %17 = arith.addf %14, %16 : vector<2x256xf32>
    %cst_12 = arith.constant 0.000000e+00 : f32
    %18 = vector.broadcast %cst_12 : f32 to vector<2x256xf32>
    %19 = arith.cmpf ogt, %17, %18 : vector<2x256xf32>
    %cst_13 = arith.constant 2.000000e-01 : f32
    %20 = vector.broadcast %cst_13 : f32 to vector<2x256xf32>
    %21 = arith.mulf %20, %17 : vector<2x256xf32>
    %22 = arith.select %19, %17, %21 : vector<2x256xi1>, vector<2x256xf32>
    %c0_14 = arith.constant 0 : index
    %c0_15 = arith.constant 0 : index
    %23 = vector.load %arg6[%c0_14, %c0_15] : memref<1x256xf32, #tpu.memory_space<vmem>>, vector<1x256xf32>
    %24 = vector.broadcast %23 : vector<1x256xf32> to vector<2x256xf32>
    %25 = arith.mulf %22, %24 : vector<2x256xf32>
    %cst_16 = arith.constant dense<0.000000e+00> : vector<2xf32>
    %26 = vector.multi_reduction <add>, %25, %cst_16 [1] : vector<2x256xf32> to vector<2xf32>
    %27 = vector.shape_cast %26 : vector<2xf32> to vector<2x1xf32>
    %c0_17 = arith.constant 0 : index
    %28 = memref.load %arg7[%c0_17] : memref<1xf32, #tpu.memory_space<smem>>
    %29 = vector.broadcast %28 : f32 to vector<2x1xf32>
    %30 = arith.addf %27, %29 : vector<2x1xf32>
    %c0_18 = arith.constant 0 : index
    %c0_19 = arith.constant 0 : index
    %31 = vector.load %arg8[%c0_18, %c0_19] : memref<2x1xf32, #tpu.memory_space<vmem>>, vector<2x1xf32>
    tpu.vector_store %arg8[%c0_18, %c0_19], %30 {strides = array<i32>} : memref<2x1xf32, #tpu.memory_space<vmem>>, vector<2x1xf32>,
    return
  }
  func.func @transform_0(%arg0: i32) -> (i32, i32) {
    %c0_i32 = arith.constant 0 : i32
    %c0_i32_0 = arith.constant 0 : i32
    return %arg0, %c0_i32 : i32, i32
  }
  func.func @transform_1(%arg0: i32) -> (i32, i32) {
    %c0_i32 = arith.constant 0 : i32
    %c0_i32_0 = arith.constant 0 : i32
    %c0_i32_1 = arith.constant 0 : i32
    return %c0_i32, %c0_i32_0 : i32, i32
  }
  func.func @transform_2(%arg0: i32) -> (i32, i32) {
    %c0_i32 = arith.constant 0 : i32
    %c0_i32_0 = arith.constant 0 : i32
    %c0_i32_1 = arith.constant 0 : i32
    return %c0_i32, %c0_i32_0 : i32, i32
  }
  func.func @transform_3(%arg0: i32) -> (i32, i32) {
    %c0_i32 = arith.constant 0 : i32
    %c0_i32_0 = arith.constant 0 : i32
    %c0_i32_1 = arith.constant 0 : i32
    return %c0_i32, %c0_i32_0 : i32, i32
  }
  func.func @transform_4(%arg0: i32) -> (i32, i32) {
    %c0_i32 = arith.constant 0 : i32
    %c0_i32_0 = arith.constant 0 : i32
    %c0_i32_1 = arith.constant 0 : i32
    return %c0_i32, %c0_i32_0 : i32, i32
  }
  func.func @transform_5(%arg0: i32) -> (i32, i32) {
    %c0_i32 = arith.constant 0 : i32
    %c0_i32_0 = arith.constant 0 : i32
    %c0_i32_1 = arith.constant 0 : i32
    return %c0_i32, %c0_i32_0 : i32, i32
  }
  func.func @transform_6(%arg0: i32) -> i32 {
    %c0_i32 = arith.constant 0 : i32
    %c0_i32_0 = arith.constant 0 : i32
    return %c0_i32 : i32
  }
  func.func @transform_7(%arg0: i32) -> (i32, i32) {
    %c0_i32 = arith.constant 0 : i32
    %c0_i32_0 = arith.constant 0 : i32
    return %arg0, %c0_i32 : i32, i32
  }
}

</mosaic_0001>

<llo_original>
// kernel: discriminator_forward.1
$region0: #{discriminator_forward.1}
  #allocation0 [shape = 'u32[]', space=smem, size = 0x4, offset = 0x4, fixed_abs, tag = 'smem constant byte address 0x4 - core index']
  #allocation1 [shape = 'u32[72,128]{1,0:T(1,128)}', space=vmem, size = 0x9000, scoped, tag = 'internal scratch']
  #allocation2 [shape = 'f32[1]{0:T(128)S(6)}', space=smem, size = 0x200, scoped, tag = 'scoped memory for discriminator_forward.1']
  %s0 = inlined_call_operand.vmem [shape: f32[2,1024], index: 0, kind: input, shape index: {}]
  %s1 = inlined_call_operand.hbm [shape: bf16[1024,512], index: 1, kind: input, shape index: {}]
  %s2 = inlined_call_operand.vmem [shape: f32[1,512], index: 2, kind: input, shape index: {}]
  %s3 = inlined_call_operand.hbm [shape: bf16[512,256], index: 3, kind: input, shape index: {}]
  %s4 = inlined_call_operand.vmem [shape: f32[1,256], index: 4, kind: input, shape index: {}]
  %s5 = inlined_call_operand.vmem [shape: f32[1,256], index: 5, kind: input, shape index: {}]
  %s6 = inlined_call_operand.<no memory space> [shape: f32[1], index: 6, kind: input, shape index: {}]
  %s7 = inlined_call_operand.vmem [shape: f32[2,1], index: 7, kind: output, shape index: {}]
  %s8 = sld [smem:[#allocation0]]
  $region46: #{discriminator_forward.1} parent=0
    _
  %s10 = ssub.s32 1, %s8
  %s11 = scalar_select 0, %s10, %s8
  %12 = sst [smem:[#allocation2]] %s6
  $region1: #{discriminator_forward.1} parent=0
    #allocation3 [shape = 'u8[1048576]{0}', space=vmem, size = 0x100000, scoped, tag = 'input window, operand 1, single buffered']
    #allocation4 [shape = 's32[1]{0}', space=sflag, size = 0x4, scoped, tag = 'scoped memory for discriminator_forward.1']
    #allocation5 [shape = 'u8[262144]{0}', space=vmem, size = 0x40000, scoped, tag = 'input window, operand 3, single buffered']
    #allocation6 [shape = 's32[1]{0}', space=sflag, size = 0x4, scoped, tag = 'scoped memory for discriminator_forward.1']
    %13 = vsyncpa [#allocation4], 0
    %14 = vsyncpa [#allocation6], 0
    // Predicated region
    $region2: #{discriminator_forward.1} parent=1 // pred_check
      _
    $region3: #{discriminator_forward.1} parent=1 // pred_check_branch
      %16 = sbr.rel (0) target = $region5
    $region4: #{discriminator_forward.1} parent=1 // pred_region
      _
    $region5: #{discriminator_forward.1} parent=1 // pred_fallthru
      _
    // Predicated region
    $region6: #{discriminator_forward.1} parent=1 // pred_check
      _
    $region7: #{discriminator_forward.1} parent=1 // pred_check_branch
      %18 = sbr.rel (0) target = $region9
    $region8: #{discriminator_forward.1} parent=1 // pred_region
      %20 = vsyncadd [#allocation4], 0
      %s21 = sshll.u32 %s1, 4
      %s22 = int_to_ptr.hbm [resolvable:$true] %s21
      %s23 = sshll.u32 [#allocation3], 4
      %s24 = int_to_ptr.vmem [resolvable:$true] %s23
      %29 = dma.hbm_to_vmem [thread:$0]  %s22, 32768, %s24, [#allocation4], 256, 256, 16
    $region9: #{discriminator_forward.1} parent=1 // pred_fallthru
      _
    // Predicated region
    $region10: #{discriminator_forward.1} parent=1 // pred_check
      _
    $region11: #{discriminator_forward.1} parent=1 // pred_check_branch
      %31 = sbr.rel (0) target = $region13
    $region12: #{discriminator_forward.1} parent=1 // pred_region
      _
    $region13: #{discriminator_forward.1} parent=1 // pred_fallthru
      _
    // Predicated region
    $region14: #{discriminator_forward.1} parent=1 // pred_check
      _
    $region15: #{discriminator_forward.1} parent=1 // pred_check_branch
      %33 = sbr.rel (0) target = $region17
    $region16: #{discriminator_forward.1} parent=1 // pred_region
      %35 = vsyncadd [#allocation6], 0
      %s36 = sshll.u32 %s3, 4
      %s37 = int_to_ptr.hbm [resolvable:$true] %s36
      %s38 = sshll.u32 [#allocation5], 4
      %s39 = int_to_ptr.vmem [resolvable:$true] %s38
      %44 = dma.hbm_to_vmem [thread:$0]  %s37, 8192, %s39, [#allocation6], 128, 128, 8
    $region17: #{discriminator_forward.1} parent=1 // pred_fallthru
      _
    // Predicated region
    $region18: #{discriminator_forward.1} parent=1 // pred_check
      _
    $region19: #{discriminator_forward.1} parent=1 // pred_check_branch
      %46 = sbr.rel (0) target = $region21
    $region20: #{discriminator_forward.1} parent=1 // pred_region
      _
    $region21: #{discriminator_forward.1} parent=1 // pred_fallthru
      _
    // Predicated region
    $region22: #{discriminator_forward.1} parent=1 // pred_check
      _
    $region23: #{discriminator_forward.1} parent=1 // pred_check_branch
      %48 = sbr.rel (0) target = $region25
    $region24: #{discriminator_forward.1} parent=1 // pred_region
      _
    $region25: #{discriminator_forward.1} parent=1 // pred_fallthru
      _
    // Predicated region
    $region26: #{discriminator_forward.1} parent=1 // pred_check
      _
    $region27: #{discriminator_forward.1} parent=1 // pred_check_branch
      %50 = sbr.rel (0) target = $region29
    $region28: #{discriminator_forward.1} parent=1 // pred_region
      _
    $region29: #{discriminator_forward.1} parent=1 // pred_fallthru
      _
    // Predicated region
    $region30: #{discriminator_forward.1} parent=1 // pred_check
      _
    $region31: #{discriminator_forward.1} parent=1 // pred_check_branch
      %52 = sbr.rel (0) target = $region33
    $region32: #{discriminator_forward.1} parent=1 // pred_region
      %54 = dma.done [#allocation4], 32768
    $region33: #{discriminator_forward.1} parent=1 // pred_fallthru
      _
    // Predicated region
    $region34: #{discriminator_forward.1} parent=1 // pred_check
      _
    $region35: #{discriminator_forward.1} parent=1 // pred_check_branch
      %56 = sbr.rel (0) target = $region37
    $region36: #{discriminator_forward.1} parent=1 // pred_region
      %58 = dma.done [#allocation6], 8192
    $region37: #{discriminator_forward.1} parent=1 // pred_fallthru
      _
    %v59 = vld [vmem:[%s0] sm:$0xff]
    %v60 = vld [vmem:[%s0 + $0x8] sm:$0xff]
    %63 = vst [vmem:[#allocation1] ss:$4 sm:$0xff] %v59
    %s64 = scalar_lea.vmem [#allocation1], 32
    %65 = vst [vmem:[%s64] ss:$4 sm:$0xff] %v60
    %v66 = vld.sshfl [vmem:[#allocation1] sm:$0xff pattern:$0x73625140]
    %v67 = vld.sshfl [vmem:[#allocation1 + $0x8] sm:$0xff pattern:$0x73625140]
    %v68 = vld.sshfl [vmem:[#allocation1 + $0x10] sm:$0xff pattern:$0x73625140]
    %v69 = vld.sshfl [vmem:[#allocation1 + $0x18] sm:$0xff pattern:$0x73625140]
    %v70 = vld.sshfl [vmem:[#allocation1 + $0x20] sm:$0xff pattern:$0x73625140]
    %v71 = vld.sshfl [vmem:[#allocation1 + $0x28] sm:$0xff pattern:$0x73625140]
    %v72 = vld.sshfl [vmem:[#allocation1 + $0x30] sm:$0xff pattern:$0x73625140]
    %v73 = vld.sshfl [vmem:[#allocation1 + $0x38] sm:$0xff pattern:$0x73625140]
    %v82 = vpack.c.bf16 %v66, %v66
    %v83 = vpack.c.bf16 %v67, %v67
    %v84 = vpack.c.bf16 %v68, %v68
    %v85 = vpack.c.bf16 %v69, %v69
    %v86 = vpack.c.bf16 %v70, %v70
    %v87 = vpack.c.bf16 %v71, %v71
    %v88 = vpack.c.bf16 %v72, %v72
    %v89 = vpack.c.bf16 %v73, %v73
    %v90 = vld [vmem:[#allocation3] sm:$0xff]
    %v91 = vld [vmem:[#allocation3 + $0x8] sm:$0xff]
    %v92 = vld [vmem:[#allocation3 + $0x10] sm:$0xff]
    %v93 = vld [vmem:[#allocation3 + $0x18] sm:$0xff]
    %v94 = vld [vmem:[#allocation3 + $0x20] sm:$0xff]
    %v95 = vld [vmem:[#allocation3 + $0x28] sm:$0xff]
    %v96 = vld [vmem:[#allocation3 + $0x30] sm:$0xff]
    %v97 = vld [vmem:[#allocation3 + $0x38] sm:$0xff]
    %v98 = vld [vmem:[#allocation3 + $0x40] sm:$0xff]
    %v99 = vld [vmem:[#allocation3 + $0x48] sm:$0xff]
    %v100 = vld [vmem:[#allocation3 + $0x50] sm:$0xff]
    %v101 = vld [vmem:[#allocation3 + $0x58] sm:$0xff]
    %v102 = vld [vmem:[#allocation3 + $0x60] sm:$0xff]
    %v103 = vld [vmem:[#allocation3 + $0x68] sm:$0xff]
    %v104 = vld [vmem:[#allocation3 + $0x70] sm:$0xff]
    %v105 = vld [vmem:[#allocation3 + $0x78] sm:$0xff]
    %v106 = vld [vmem:[#allocation3 + $0x80] sm:$0xff]
    %v107 = vld [vmem:[#allocation3 + $0x88] sm:$0xff]
    %v108 = vld [vmem:[#allocation3 + $0x90] sm:$0xff]
    %v109 = vld [vmem:[#allocation3 + $0x98] sm:$0xff]
    %v110 = vld [vmem:[#allocation3 + $0xa0] sm:$0xff]
    %v111 = vld [vmem:[#allocation3 + $0xa8] sm:$0xff]
    %v112 = vld [vmem:[#allocation3 + $0xb0] sm:$0xff]
    %v113 = vld [vmem:[#allocation3 + $0xb8] sm:$0xff]
    %v114 = vld [vmem:[#allocation3 + $0xc0] sm:$0xff]
    %v115 = vld [vmem:[#allocation3 + $0xc8] sm:$0xff]
    %v116 = vld [vmem:[#allocation3 + $0xd0] sm:$0xff]
    %v117 = vld [vmem:[#allocation3 + $0xd8] sm:$0xff]
    %v118 = vld [vmem:[#allocation3 + $0xe0] sm:$0xff]
    %v119 = vld [vmem:[#allocation3 + $0xe8] sm:$0xff]
    %v120 = vld [vmem:[#allocation3 + $0xf0] sm:$0xff]
    %v121 = vld [vmem:[#allocation3 + $0xf8] sm:$0xff]
    %v122 = vld [vmem:[#allocation3 + $0x100] sm:$0xff]
    %v123 = vld [vmem:[#allocation3 + $0x108] sm:$0xff]
    %v124 = vld [vmem:[#allocation3 + $0x110] sm:$0xff]
    %v125 = vld [vmem:[#allocation3 + $0x118] sm:$0xff]
    %v126 = vld [vmem:[#allocation3 + $0x120] sm:$0xff]
    %v127 = vld [vmem:[#allocation3 + $0x128] sm:$0xff]
    %v128 = vld [vmem:[#allocation3 + $0x130] sm:$0xff]
    %v129 = vld [vmem:[#allocation3 + $0x138] sm:$0xff]
    %v130 = vld [vmem:[#allocation3 + $0x140] sm:$0xff]
    %v131 = vld [vmem:[#allocation3 + $0x148] sm:$0xff]
    %v132 = vld [vmem:[#allocation3 + $0x150] sm:$0xff]
    %v133 = vld [vmem:[#allocation3 + $0x158] sm:$0xff]
    %v134 = vld [vmem:[#allocation3 + $0x160] sm:$0xff]
    %v135 = vld [vmem:[#allocation3 + $0x168] sm:$0xff]
    %v136 = vld [vmem:[#allocation3 + $0x170] sm:$0xff]
    %v137 = vld [vmem:[#allocation3 + $0x178] sm:$0xff]
    %v138 = vld [vmem:[#allocation3 + $0x180] sm:$0xff]
    %v139 = vld [vmem:[#allocation3 + $0x188] sm:$0xff]
    %v140 = vld [vmem:[#allocation3 + $0x190] sm:$0xff]
    %v141 = vld [vmem:[#allocation3 + $0x198] sm:$0xff]
    %v142 = vld [vmem:[#allocation3 + $0x1a0] sm:$0xff]
    %v143 = vld [vmem:[#allocation3 + $0x1a8] sm:$0xff]
    %v144 = vld [vmem:[#allocation3 + $0x1b0] sm:$0xff]
    %v145 = vld [vmem:[#allocation3 + $0x1b8] sm:$0xff]
    %v146 = vld [vmem:[#allocation3 + $0x1c0] sm:$0xff]
    %v147 = vld [vmem:[#allocation3 + $0x1c8] sm:$0xff]
    %v148 = vld [vmem:[#allocation3 + $0x1d0] sm:$0xff]
    %v149 = vld [vmem:[#allocation3 + $0x1d8] sm:$0xff]
    %v150 = vld [vmem:[#allocation3 + $0x1e0] sm:$0xff]
    %v151 = vld [vmem:[#allocation3 + $0x1e8] sm:$0xff]
    %v152 = vld [vmem:[#allocation3 + $0x1f0] sm:$0xff]
    %v153 = vld [vmem:[#allocation3 + $0x1f8] sm:$0xff]
    %v154 = vld [vmem:[#allocation3 + $0x200] sm:$0xff]
    %v155 = vld [vmem:[#allocation3 + $0x208] sm:$0xff]
    %v156 = vld [vmem:[#allocation3 + $0x210] sm:$0xff]
    %v157 = vld [vmem:[#allocation3 + $0x218] sm:$0xff]
    %v158 = vld [vmem:[#allocation3 + $0x220] sm:$0xff]
    %v159 = vld [vmem:[#allocation3 + $0x228] sm:$0xff]
    %v160 = vld [vmem:[#allocation3 + $0x230] sm:$0xff]
    %v161 = vld [vmem:[#allocation3 + $0x238] sm:$0xff]
    %v162 = vld [vmem:[#allocation3 + $0x240] sm:$0xff]
    %v163 = vld [vmem:[#allocation3 + $0x248] sm:$0xff]
    %v164 = vld [vmem:[#allocation3 + $0x250] sm:$0xff]
    %v165 = vld [vmem:[#allocation3 + $0x258] sm:$0xff]
    %v166 = vld [vmem:[#allocation3 + $0x260] sm:$0xff]
    %v167 = vld [vmem:[#allocation3 + $0x268] sm:$0xff]
    %v168 = vld [vmem:[#allocation3 + $0x270] sm:$0xff]
    %v169 = vld [vmem:[#allocation3 + $0x278] sm:$0xff]
    %v170 = vld [vmem:[#allocation3 + $0x280] sm:$0xff]
    %v171 = vld [vmem:[#allocation3 + $0x288] sm:$0xff]
    %v172 = vld [vmem:[#allocation3 + $0x290] sm:$0xff]
    %v173 = vld [vmem:[#allocation3 + $0x298] sm:$0xff]
    %v174 = vld [vmem:[#allocation3 + $0x2a0] sm:$0xff]
    %v175 = vld [vmem:[#allocation3 + $0x2a8] sm:$0xff]
    %v176 = vld [vmem:[#allocation3 + $0x2b0] sm:$0xff]
    %v177 = vld [vmem:[#allocation3 + $0x2b8] sm:$0xff]
    %v178 = vld [vmem:[#allocation3 + $0x2c0] sm:$0xff]
    %v179 = vld [vmem:[#allocation3 + $0x2c8] sm:$0xff]
    %v180 = vld [vmem:[#allocation3 + $0x2d0] sm:$0xff]
    %v181 = vld [vmem:[#allocation3 + $0x2d8] sm:$0xff]
    %v182 = vld [vmem:[#allocation3 + $0x2e0] sm:$0xff]
    %v183 = vld [vmem:[#allocation3 + $0x2e8] sm:$0xff]
    %v184 = vld [vmem:[#allocation3 + $0x2f0] sm:$0xff]
    %v185 = vld [vmem:[#allocation3 + $0x2f8] sm:$0xff]
    %v186 = vld [vmem:[#allocation3 + $0x300] sm:$0xff]
    %v187 = vld [vmem:[#allocation3 + $0x308] sm:$0xff]
    %v188 = vld [vmem:[#allocation3 + $0x310] sm:$0xff]
    %v189 = vld [vmem:[#allocation3 + $0x318] sm:$0xff]
    %v190 = vld [vmem:[#allocation3 + $0x320] sm:$0xff]
    %v191 = vld [vmem:[#allocation3 + $0x328] sm:$0xff]
    %v192 = vld [vmem:[#allocation3 + $0x330] sm:$0xff]
    %v193 = vld [vmem:[#allocation3 + $0x338] sm:$0xff]
    %v194 = vld [vmem:[#allocation3 + $0x340] sm:$0xff]
    %v195 = vld [vmem:[#allocation3 + $0x348] sm:$0xff]
    %v196 = vld [vmem:[#allocation3 + $0x350] sm:$0xff]
    %v197 = vld [vmem:[#allocation3 + $0x358] sm:$0xff]
    %v198 = vld [vmem:[#allocation3 + $0x360] sm:$0xff]
    %v199 = vld [vmem:[#allocation3 + $0x368] sm:$0xff]
    %v200 = vld [vmem:[#allocation3 + $0x370] sm:$0xff]
    %v201 = vld [vmem:[#allocation3 + $0x378] sm:$0xff]
    %v202 = vld [vmem:[#allocation3 + $0x380] sm:$0xff]
    %v203 = vld [vmem:[#allocation3 + $0x388] sm:$0xff]
    %v204 = vld [vmem:[#allocation3 + $0x390] sm:$0xff]
    %v205 = vld [vmem:[#allocation3 + $0x398] sm:$0xff]
    %v206 = vld [vmem:[#allocation3 + $0x3a0] sm:$0xff]
    %v207 = vld [vmem:[#allocation3 + $0x3a8] sm:$0xff]
    %v208 = vld [vmem:[#allocation3 + $0x3b0] sm:$0xff]
    %v209 = vld [vmem:[#allocation3 + $0x3b8] sm:$0xff]
    %v210 = vld [vmem:[#allocation3 + $0x3c0] sm:$0xff]
    %v211 = vld [vmem:[#allocation3 + $0x3c8] sm:$0xff]
    %v212 = vld [vmem:[#allocation3 + $0x3d0] sm:$0xff]
    %v213 = vld [vmem:[#allocation3 + $0x3d8] sm:$0xff]
    %v214 = vld [vmem:[#allocation3 + $0x3e0] sm:$0xff]
    %v215 = vld [vmem:[#allocation3 + $0x3e8] sm:$0xff]
    %v216 = vld [vmem:[#allocation3 + $0x3f0] sm:$0xff]
    %v217 = vld [vmem:[#allocation3 + $0x3f8] sm:$0xff]
    %v218 = vld [vmem:[#allocation3 + $0x400] sm:$0xff]
    %v219 = vld [vmem:[#allocation3 + $0x408] sm:$0xff]
    %v220 = vld [vmem:[#allocation3 + $0x410] sm:$0xff]
    %v221 = vld [vmem:[#allocation3 + $0x418] sm:$0xff]
    %v222 = vld [vmem:[#allocation3 + $0x420] sm:$0xff]
    %v223 = vld [vmem:[#allocation3 + $0x428] sm:$0xff]
    %v224 = vld [vmem:[#allocation3 + $0x430] sm:$0xff]
    %v225 = vld [vmem:[#allocation3 + $0x438] sm:$0xff]
    %v226 = vld [vmem:[#allocation3 + $0x440] sm:$0xff]
    %v227 = vld [vmem:[#allocation3 + $0x448] sm:$0xff]
    %v228 = vld [vmem:[#allocation3 + $0x450] sm:$0xff]
    %v229 = vld [vmem:[#allocation3 + $0x458] sm:$0xff]
    %v230 = vld [vmem:[#allocation3 + $0x460] sm:$0xff]
    %v231 = vld [vmem:[#allocation3 + $0x468] sm:$0xff]
    %v232 = vld [vmem:[#allocation3 + $0x470] sm:$0xff]
    %v233 = vld [vmem:[#allocation3 + $0x478] sm:$0xff]
    %v234 = vld [vmem:[#allocation3 + $0x480] sm:$0xff]
    %v235 = vld [vmem:[#allocation3 + $0x488] sm:$0xff]
    %v236 = vld [vmem:[#allocation3 + $0x490] sm:$0xff]
    %v237 = vld [vmem:[#allocation3 + $0x498] sm:$0xff]
    %v238 = vld [vmem:[#allocation3 + $0x4a0] sm:$0xff]
    %v239 = vld [vmem:[#allocation3 + $0x4a8] sm:$0xff]
    %v240 = vld [vmem:[#allocation3 + $0x4b0] sm:$0xff]
    %v241 = vld [vmem:[#allocation3 + $0x4b8] sm:$0xff]
    %v242 = vld [vmem:[#allocation3 + $0x4c0] sm:$0xff]
    %v243 = vld [vmem:[#allocation3 + $0x4c8] sm:$0xff]
    %v244 = vld [vmem:[#allocation3 + $0x4d0] sm:$0xff]
    %v245 = vld [vmem:[#allocation3 + $0x4d8] sm:$0xff]
    %v246 = vld [vmem:[#allocation3 + $0x4e0] sm:$0xff]
    %v247 = vld [vmem:[#allocation3 + $0x4e8] sm:$0xff]
    %v248 = vld [vmem:[#allocation3 + $0x4f0] sm:$0xff]
    %v249 = vld [vmem:[#allocation3 + $0x4f8] sm:$0xff]
    %v250 = vld [vmem:[#allocation3 + $0x500] sm:$0xff]
    %v251 = vld [vmem:[#allocation3 + $0x508] sm:$0xff]
    %v252 = vld [vmem:[#allocation3 + $0x510] sm:$0xff]
    %v253 = vld [vmem:[#allocation3 + $0x518] sm:$0xff]
    %v254 = vld [vmem:[#allocation3 + $0x520] sm:$0xff]
    %v255 = vld [vmem:[#allocation3 + $0x528] sm:$0xff]
    %v256 = vld [vmem:[#allocation3 + $0x530] sm:$0xff]
    %v257 = vld [vmem:[#allocation3 + $0x538] sm:$0xff]
    %v258 = vld [vmem:[#allocation3 + $0x540] sm:$0xff]
    %v259 = vld [vmem:[#allocation3 + $0x548] sm:$0xff]
    %v260 = vld [vmem:[#allocation3 + $0x550] sm:$0xff]
    %v261 = vld [vmem:[#allocation3 + $0x558] sm:$0xff]
    %v262 = vld [vmem:[#allocation3 + $0x560] sm:$0xff]
    %v263 = vld [vmem:[#allocation3 + $0x568] sm:$0xff]
    %v264 = vld [vmem:[#allocation3 + $0x570] sm:$0xff]
    %v265 = vld [vmem:[#allocation3 + $0x578] sm:$0xff]
    %v266 = vld [vmem:[#allocation3 + $0x580] sm:$0xff]
    %v267 = vld [vmem:[#allocation3 + $0x588] sm:$0xff]
    %v268 = vld [vmem:[#allocation3 + $0x590] sm:$0xff]
    %v269 = vld [vmem:[#allocation3 + $0x598] sm:$0xff]
    %v270 = vld [vmem:[#allocation3 + $0x5a0] sm:$0xff]
    %v271 = vld [vmem:[#allocation3 + $0x5a8] sm:$0xff]
    %v272 = vld [vmem:[#allocation3 + $0x5b0] sm:$0xff]
    %v273 = vld [vmem:[#allocation3 + $0x5b8] sm:$0xff]
    %v274 = vld [vmem:[#allocation3 + $0x5c0] sm:$0xff]
    %v275 = vld [vmem:[#allocation3 + $0x5c8] sm:$0xff]
    %v276 = vld [vmem:[#allocation3 + $0x5d0] sm:$0xff]
    %v277 = vld [vmem:[#allocation3 + $0x5d8] sm:$0xff]
    %v278 = vld [vmem:[#allocation3 + $0x5e0] sm:$0xff]
    %v279 = vld [vmem:[#allocation3 + $0x5e8] sm:$0xff]
    %v280 = vld [vmem:[#allocation3 + $0x5f0] sm:$0xff]
    %v281 = vld [vmem:[#allocation3 + $0x5f8] sm:$0xff]
    %v282 = vld [vmem:[#allocation3 + $0x600] sm:$0xff]
    %v283 = vld [vmem:[#allocation3 + $0x608] sm:$0xff]
    %v284 = vld [vmem:[#allocation3 + $0x610] sm:$0xff]
    %v285 = vld [vmem:[#allocation3 + $0x618] sm:$0xff]
    %v286 = vld [vmem:[#allocation3 + $0x620] sm:$0xff]
    %v287 = vld [vmem:[#allocation3 + $0x628] sm:$0xff]
    %v288 = vld [vmem:[#allocation3 + $0x630] sm:$0xff]
    %v289 = vld [vmem:[#allocation3 + $0x638] sm:$0xff]
    %v290 = vld [vmem:[#allocation3 + $0x640] sm:$0xff]
    %v291 = vld [vmem:[#allocation3 + $0x648] sm:$0xff]
    %v292 = vld [vmem:[#allocation3 + $0x650] sm:$0xff]
    %v293 = vld [vmem:[#allocation3 + $0x658] sm:$0xff]
    %v294 = vld [vmem:[#allocation3 + $0x660] sm:$0xff]
    %v295 = vld [vmem:[#allocation3 + $0x668] sm:$0xff]
    %v296 = vld [vmem:[#allocation3 + $0x670] sm:$0xff]
    %v297 = vld [vmem:[#allocation3 + $0x678] sm:$0xff]
    %v298 = vld [vmem:[#allocation3 + $0x680] sm:$0xff]
    %v299 = vld [vmem:[#allocation3 + $0x688] sm:$0xff]
    %v300 = vld [vmem:[#allocation3 + $0x690] sm:$0xff]
    %v301 = vld [vmem:[#allocation3 + $0x698] sm:$0xff]
    %v302 = vld [vmem:[#allocation3 + $0x6a0] sm:$0xff]
    %v303 = vld [vmem:[#allocation3 + $0x6a8] sm:$0xff]
    %v304 = vld [vmem:[#allocation3 + $0x6b0] sm:$0xff]
    %v305 = vld [vmem:[#allocation3 + $0x6b8] sm:$0xff]
    %v306 = vld [vmem:[#allocation3 + $0x6c0] sm:$0xff]
    %v307 = vld [vmem:[#allocation3 + $0x6c8] sm:$0xff]
    %v308 = vld [vmem:[#allocation3 + $0x6d0] sm:$0xff]
    %v309 = vld [vmem:[#allocation3 + $0x6d8] sm:$0xff]
    %v310 = vld [vmem:[#allocation3 + $0x6e0] sm:$0xff]
    %v311 = vld [vmem:[#allocation3 + $0x6e8] sm:$0xff]
    %v312 = vld [vmem:[#allocation3 + $0x6f0] sm:$0xff]
    %v313 = vld [vmem:[#allocation3 + $0x6f8] sm:$0xff]
    %v314 = vld [vmem:[#allocation3 + $0x700] sm:$0xff]
    %v315 = vld [vmem:[#allocation3 + $0x708] sm:$0xff]
    %v316 = vld [vmem:[#allocation3 + $0x710] sm:$0xff]
    %v317 = vld [vmem:[#allocation3 + $0x718] sm:$0xff]
    %v318 = vld [vmem:[#allocation3 + $0x720] sm:$0xff]
    %v319 = vld [vmem:[#allocation3 + $0x728] sm:$0xff]
    %v320 = vld [vmem:[#allocation3 + $0x730] sm:$0xff]
    %v321 = vld [vmem:[#allocation3 + $0x738] sm:$0xff]
    %v322 = vld [vmem:[#allocation3 + $0x740] sm:$0xff]
    %v323 = vld [vmem:[#allocation3 + $0x748] sm:$0xff]
    %v324 = vld [vmem:[#allocation3 + $0x750] sm:$0xff]
    %v325 = vld [vmem:[#allocation3 + $0x758] sm:$0xff]
    %v326 = vld [vmem:[#allocation3 + $0x760] sm:$0xff]
    %v327 = vld [vmem:[#allocation3 + $0x768] sm:$0xff]
    %v328 = vld [vmem:[#allocation3 + $0x770] sm:$0xff]
    %v329 = vld [vmem:[#allocation3 + $0x778] sm:$0xff]
    %v330 = vld [vmem:[#allocation3 + $0x780] sm:$0xff]
    %v331 = vld [vmem:[#allocation3 + $0x788] sm:$0xff]
    %v332 = vld [vmem:[#allocation3 + $0x790] sm:$0xff]
    %v333 = vld [vmem:[#allocation3 + $0x798] sm:$0xff]
    %v334 = vld [vmem:[#allocation3 + $0x7a0] sm:$0xff]
    %v335 = vld [vmem:[#allocation3 + $0x7a8] sm:$0xff]
    %v336 = vld [vmem:[#allocation3 + $0x7b0] sm:$0xff]
    %v337 = vld [vmem:[#allocation3 + $0x7b8] sm:$0xff]
    %v338 = vld [vmem:[#allocation3 + $0x7c0] sm:$0xff]
    %v339 = vld [vmem:[#allocation3 + $0x7c8] sm:$0xff]
    %v340 = vld [vmem:[#allocation3 + $0x7d0] sm:$0xff]
    %v341 = vld [vmem:[#allocation3 + $0x7d8] sm:$0xff]
    %v342 = vld [vmem:[#allocation3 + $0x7e0] sm:$0xff]
    %v343 = vld [vmem:[#allocation3 + $0x7e8] sm:$0xff]
    %v344 = vld [vmem:[#allocation3 + $0x7f0] sm:$0xff]
    %v345 = vld [vmem:[#allocation3 + $0x7f8] sm:$0xff]
    %v346 = vld [vmem:[%s2] sm:$0xf]
    %v348 = vperm.slane %v346, 0
    %v349 = vperm.slane %v346, 1
    %v350 = vperm.slane %v346, 2
    %v351 = vperm.slane %v346, 3
    %v612 = vunpack.c.l.b16 %v90
    %v613 = vunpack.c.h.b16 %v90
    %v614 = vunpack.c.l.b16 %v91
    %v615 = vunpack.c.h.b16 %v91
    %v616 = vunpack.c.l.b16 %v92
    %v617 = vunpack.c.h.b16 %v92
    %v618 = vunpack.c.l.b16 %v93
    %v619 = vunpack.c.h.b16 %v93
    %v620 = vunpack.c.l.b16 %v94
    %v621 = vunpack.c.h.b16 %v94
    %v622 = vunpack.c.l.b16 %v95
    %v623 = vunpack.c.h.b16 %v95
    %v624 = vunpack.c.l.b16 %v96
    %v625 = vunpack.c.h.b16 %v96
    %v626 = vunpack.c.l.b16 %v97
    %v627 = vunpack.c.h.b16 %v97
    %v628 = vunpack.c.l.b16 %v98
    %v629 = vunpack.c.h.b16 %v98
    %v630 = vunpack.c.l.b16 %v99
    %v631 = vunpack.c.h.b16 %v99
    %v632 = vunpack.c.l.b16 %v100
    %v633 = vunpack.c.h.b16 %v100
    %v634 = vunpack.c.l.b16 %v101
    %v635 = vunpack.c.h.b16 %v101
    %v636 = vunpack.c.l.b16 %v102
    %v637 = vunpack.c.h.b16 %v102
    %v638 = vunpack.c.l.b16 %v103
    %v639 = vunpack.c.h.b16 %v103
    %v640 = vunpack.c.l.b16 %v104
    %v641 = vunpack.c.h.b16 %v104
    %v642 = vunpack.c.l.b16 %v105
    %v643 = vunpack.c.h.b16 %v105
    %v644 = vunpack.c.l.b16 %v106
    %v645 = vunpack.c.h.b16 %v106
    %v646 = vunpack.c.l.b16 %v107
    %v647 = vunpack.c.h.b16 %v107
    %v648 = vunpack.c.l.b16 %v108
    %v649 = vunpack.c.h.b16 %v108
    %v650 = vunpack.c.l.b16 %v109
    %v651 = vunpack.c.h.b16 %v109
    %v652 = vunpack.c.l.b16 %v110
    %v653 = vunpack.c.h.b16 %v110
    %v654 = vunpack.c.l.b16 %v111
    %v655 = vunpack.c.h.b16 %v111
    %v656 = vunpack.c.l.b16 %v112
    %v657 = vunpack.c.h.b16 %v112
    %v658 = vunpack.c.l.b16 %v113
    %v659 = vunpack.c.h.b16 %v113
    %v660 = vunpack.c.l.b16 %v114
    %v661 = vunpack.c.h.b16 %v114
    %v662 = vunpack.c.l.b16 %v115
    %v663 = vunpack.c.h.b16 %v115
    %v664 = vunpack.c.l.b16 %v116
    %v665 = vunpack.c.h.b16 %v116
    %v666 = vunpack.c.l.b16 %v117
    %v667 = vunpack.c.h.b16 %v117
    %v668 = vunpack.c.l.b16 %v118
    %v669 = vunpack.c.h.b16 %v118
    %v670 = vunpack.c.l.b16 %v119
    %v671 = vunpack.c.h.b16 %v119
    %v672 = vunpack.c.l.b16 %v120
    %v673 = vunpack.c.h.b16 %v120
    %v674 = vunpack.c.l.b16 %v121
    %v675 = vunpack.c.h.b16 %v121
    %v676 = vunpack.c.l.b16 %v122
    %v677 = vunpack.c.h.b16 %v122
    %v678 = vunpack.c.l.b16 %v123
    %v679 = vunpack.c.h.b16 %v123
    %v680 = vunpack.c.l.b16 %v124
    %v681 = vunpack.c.h.b16 %v124
    %v682 = vunpack.c.l.b16 %v125
    %v683 = vunpack.c.h.b16 %v125
    %v684 = vunpack.c.l.b16 %v126
    %v685 = vunpack.c.h.b16 %v126
    %v686 = vunpack.c.l.b16 %v127
    %v687 = vunpack.c.h.b16 %v127
    %v688 = vunpack.c.l.b16 %v128
    %v689 = vunpack.c.h.b16 %v128
    %v690 = vunpack.c.l.b16 %v129
    %v691 = vunpack.c.h.b16 %v129
    %v692 = vunpack.c.l.b16 %v130
    %v693 = vunpack.c.h.b16 %v130
    %v694 = vunpack.c.l.b16 %v131
    %v695 = vunpack.c.h.b16 %v131
    %v696 = vunpack.c.l.b16 %v132
    %v697 = vunpack.c.h.b16 %v132
    %v698 = vunpack.c.l.b16 %v133
    %v699 = vunpack.c.h.b16 %v133
    %v700 = vunpack.c.l.b16 %v134
    %v701 = vunpack.c.h.b16 %v134
    %v702 = vunpack.c.l.b16 %v135
    %v703 = vunpack.c.h.b16 %v135
    %v704 = vunpack.c.l.b16 %v136
    %v705 = vunpack.c.h.b16 %v136
    %v706 = vunpack.c.l.b16 %v137
    %v707 = vunpack.c.h.b16 %v137
    %v708 = vunpack.c.l.b16 %v138
    %v709 = vunpack.c.h.b16 %v138
    %v710 = vunpack.c.l.b16 %v139
    %v711 = vunpack.c.h.b16 %v139
    %v712 = vunpack.c.l.b16 %v140
    %v713 = vunpack.c.h.b16 %v140
    %v714 = vunpack.c.l.b16 %v141
    %v715 = vunpack.c.h.b16 %v141
    %v716 = vunpack.c.l.b16 %v142
    %v717 = vunpack.c.h.b16 %v142
    %v718 = vunpack.c.l.b16 %v143
    %v719 = vunpack.c.h.b16 %v143
    %v720 = vunpack.c.l.b16 %v144
    %v721 = vunpack.c.h.b16 %v144
    %v722 = vunpack.c.l.b16 %v145
    %v723 = vunpack.c.h.b16 %v145
    %v724 = vunpack.c.l.b16 %v146
    %v725 = vunpack.c.h.b16 %v146
    %v726 = vunpack.c.l.b16 %v147
    %v727 = vunpack.c.h.b16 %v147
    %v728 = vunpack.c.l.b16 %v148
    %v729 = vunpack.c.h.b16 %v148
    %v730 = vunpack.c.l.b16 %v149
    %v731 = vunpack.c.h.b16 %v149
    %v732 = vunpack.c.l.b16 %v150
    %v733 = vunpack.c.h.b16 %v150
    %v734 = vunpack.c.l.b16 %v151
    %v735 = vunpack.c.h.b16 %v151
    %v736 = vunpack.c.l.b16 %v152
    %v737 = vunpack.c.h.b16 %v152
    %v738 = vunpack.c.l.b16 %v153
    %v739 = vunpack.c.h.b16 %v153
    %v740 = vunpack.c.l.b16 %v154
    %v741 = vunpack.c.h.b16 %v154
    %v742 = vunpack.c.l.b16 %v155
    %v743 = vunpack.c.h.b16 %v155
    %v744 = vunpack.c.l.b16 %v156
    %v745 = vunpack.c.h.b16 %v156
    %v746 = vunpack.c.l.b16 %v157
    %v747 = vunpack.c.h.b16 %v157
    %v748 = vunpack.c.l.b16 %v158
    %v749 = vunpack.c.h.b16 %v158
    %v750 = vunpack.c.l.b16 %v159
    %v751 = vunpack.c.h.b16 %v159
    %v752 = vunpack.c.l.b16 %v160
    %v753 = vunpack.c.h.b16 %v160
    %v754 = vunpack.c.l.b16 %v161
    %v755 = vunpack.c.h.b16 %v161
    %v756 = vunpack.c.l.b16 %v162
    %v757 = vunpack.c.h.b16 %v162
    %v758 = vunpack.c.l.b16 %v163
    %v759 = vunpack.c.h.b16 %v163
    %v760 = vunpack.c.l.b16 %v164
    %v761 = vunpack.c.h.b16 %v164
    %v762 = vunpack.c.l.b16 %v165
    %v763 = vunpack.c.h.b16 %v165
    %v764 = vunpack.c.l.b16 %v166
    %v765 = vunpack.c.h.b16 %v166
    %v766 = vunpack.c.l.b16 %v167
    %v767 = vunpack.c.h.b16 %v167
    %v768 = vunpack.c.l.b16 %v168
    %v769 = vunpack.c.h.b16 %v168
    %v770 = vunpack.c.l.b16 %v169
    %v771 = vunpack.c.h.b16 %v169
    %v772 = vunpack.c.l.b16 %v170
    %v773 = vunpack.c.h.b16 %v170
    %v774 = vunpack.c.l.b16 %v171
    %v775 = vunpack.c.h.b16 %v171
    %v776 = vunpack.c.l.b16 %v172
    %v777 = vunpack.c.h.b16 %v172
    %v778 = vunpack.c.l.b16 %v173
    %v779 = vunpack.c.h.b16 %v173
    %v780 = vunpack.c.l.b16 %v174
    %v781 = vunpack.c.h.b16 %v174
    %v782 = vunpack.c.l.b16 %v175
    %v783 = vunpack.c.h.b16 %v175
    %v784 = vunpack.c.l.b16 %v176
    %v785 = vunpack.c.h.b16 %v176
    %v786 = vunpack.c.l.b16 %v177
    %v787 = vunpack.c.h.b16 %v177
    %v788 = vunpack.c.l.b16 %v178
    %v789 = vunpack.c.h.b16 %v178
    %v790 = vunpack.c.l.b16 %v179
    %v791 = vunpack.c.h.b16 %v179
    %v792 = vunpack.c.l.b16 %v180
    %v793 = vunpack.c.h.b16 %v180
    %v794 = vunpack.c.l.b16 %v181
    %v795 = vunpack.c.h.b16 %v181
    %v796 = vunpack.c.l.b16 %v182
    %v797 = vunpack.c.h.b16 %v182
    %v798 = vunpack.c.l.b16 %v183
    %v799 = vunpack.c.h.b16 %v183
    %v800 = vunpack.c.l.b16 %v184
    %v801 = vunpack.c.h.b16 %v184
    %v802 = vunpack.c.l.b16 %v185
    %v803 = vunpack.c.h.b16 %v185
    %v804 = vunpack.c.l.b16 %v186
    %v805 = vunpack.c.h.b16 %v186
    %v806 = vunpack.c.l.b16 %v187
    %v807 = vunpack.c.h.b16 %v187
    %v808 = vunpack.c.l.b16 %v188
    %v809 = vunpack.c.h.b16 %v188
    %v810 = vunpack.c.l.b16 %v189
    %v811 = vunpack.c.h.b16 %v189
    %v812 = vunpack.c.l.b16 %v190
    %v813 = vunpack.c.h.b16 %v190
    %v814 = vunpack.c.l.b16 %v191
    %v815 = vunpack.c.h.b16 %v191
    %v816 = vunpack.c.l.b16 %v192
    %v817 = vunpack.c.h.b16 %v192
    %v818 = vunpack.c.l.b16 %v193
    %v819 = vunpack.c.h.b16 %v193
    %v820 = vunpack.c.l.b16 %v194
    %v821 = vunpack.c.h.b16 %v194
    %v822 = vunpack.c.l.b16 %v195
    %v823 = vunpack.c.h.b16 %v195
    %v824 = vunpack.c.l.b16 %v196
    %v825 = vunpack.c.h.b16 %v196
    %v826 = vunpack.c.l.b16 %v197
    %v827 = vunpack.c.h.b16 %v197
    %v828 = vunpack.c.l.b16 %v198
    %v829 = vunpack.c.h.b16 %v198
    %v830 = vunpack.c.l.b16 %v199
    %v831 = vunpack.c.h.b16 %v199
    %v832 = vunpack.c.l.b16 %v200
    %v833 = vunpack.c.h.b16 %v200
    %v834 = vunpack.c.l.b16 %v201
    %v835 = vunpack.c.h.b16 %v201
    %v836 = vunpack.c.l.b16 %v202
    %v837 = vunpack.c.h.b16 %v202
    %v838 = vunpack.c.l.b16 %v203
    %v839 = vunpack.c.h.b16 %v203
    %v840 = vunpack.c.l.b16 %v204
    %v841 = vunpack.c.h.b16 %v204
    %v842 = vunpack.c.l.b16 %v205
    %v843 = vunpack.c.h.b16 %v205
    %v844 = vunpack.c.l.b16 %v206
    %v845 = vunpack.c.h.b16 %v206
    %v846 = vunpack.c.l.b16 %v207
    %v847 = vunpack.c.h.b16 %v207
    %v848 = vunpack.c.l.b16 %v208
    %v849 = vunpack.c.h.b16 %v208
    %v850 = vunpack.c.l.b16 %v209
    %v851 = vunpack.c.h.b16 %v209
    %v852 = vunpack.c.l.b16 %v210
    %v853 = vunpack.c.h.b16 %v210
    %v854 = vunpack.c.l.b16 %v211
    %v855 = vunpack.c.h.b16 %v211
    %v856 = vunpack.c.l.b16 %v212
    %v857 = vunpack.c.h.b16 %v212
    %v858 = vunpack.c.l.b16 %v213
    %v859 = vunpack.c.h.b16 %v213
    %v860 = vunpack.c.l.b16 %v214
    %v861 = vunpack.c.h.b16 %v214
    %v862 = vunpack.c.l.b16 %v215
    %v863 = vunpack.c.h.b16 %v215
    %v864 = vunpack.c.l.b16 %v216
    %v865 = vunpack.c.h.b16 %v216
    %v866 = vunpack.c.l.b16 %v217
    %v867 = vunpack.c.h.b16 %v217
    %v868 = vunpack.c.l.b16 %v218
    %v869 = vunpack.c.h.b16 %v218
    %v870 = vunpack.c.l.b16 %v219
    %v871 = vunpack.c.h.b16 %v219
    %v872 = vunpack.c.l.b16 %v220
    %v873 = vunpack.c.h.b16 %v220
    %v874 = vunpack.c.l.b16 %v221
    %v875 = vunpack.c.h.b16 %v221
    %v876 = vunpack.c.l.b16 %v222
    %v877 = vunpack.c.h.b16 %v222
    %v878 = vunpack.c.l.b16 %v223
    %v879 = vunpack.c.h.b16 %v223
    %v880 = vunpack.c.l.b16 %v224
    %v881 = vunpack.c.h.b16 %v224
    %v882 = vunpack.c.l.b16 %v225
    %v883 = vunpack.c.h.b16 %v225
    %v884 = vunpack.c.l.b16 %v226
    %v885 = vunpack.c.h.b16 %v226
    %v886 = vunpack.c.l.b16 %v227
    %v887 = vunpack.c.h.b16 %v227
    %v888 = vunpack.c.l.b16 %v228
    %v889 = vunpack.c.h.b16 %v228
    %v890 = vunpack.c.l.b16 %v229
    %v891 = vunpack.c.h.b16 %v229
    %v892 = vunpack.c.l.b16 %v230
    %v893 = vunpack.c.h.b16 %v230
    %v894 = vunpack.c.l.b16 %v231
    %v895 = vunpack.c.h.b16 %v231
    %v896 = vunpack.c.l.b16 %v232
    %v897 = vunpack.c.h.b16 %v232
    %v898 = vunpack.c.l.b16 %v233
    %v899 = vunpack.c.h.b16 %v233
    %v900 = vunpack.c.l.b16 %v234
    %v901 = vunpack.c.h.b16 %v234
    %v902 = vunpack.c.l.b16 %v235
    %v903 = vunpack.c.h.b16 %v235
    %v904 = vunpack.c.l.b16 %v236
    %v905 = vunpack.c.h.b16 %v236
    %v906 = vunpack.c.l.b16 %v237
    %v907 = vunpack.c.h.b16 %v237
    %v908 = vunpack.c.l.b16 %v238
    %v909 = vunpack.c.h.b16 %v238
    %v910 = vunpack.c.l.b16 %v239
    %v911 = vunpack.c.h.b16 %v239
    %v912 = vunpack.c.l.b16 %v240
    %v913 = vunpack.c.h.b16 %v240
    %v914 = vunpack.c.l.b16 %v241
    %v915 = vunpack.c.h.b16 %v241
    %v916 = vunpack.c.l.b16 %v242
    %v917 = vunpack.c.h.b16 %v242
    %v918 = vunpack.c.l.b16 %v243
    %v919 = vunpack.c.h.b16 %v243
    %v920 = vunpack.c.l.b16 %v244
    %v921 = vunpack.c.h.b16 %v244
    %v922 = vunpack.c.l.b16 %v245
    %v923 = vunpack.c.h.b16 %v245
    %v924 = vunpack.c.l.b16 %v246
    %v925 = vunpack.c.h.b16 %v246
    %v926 = vunpack.c.l.b16 %v247
    %v927 = vunpack.c.h.b16 %v247
    %v928 = vunpack.c.l.b16 %v248
    %v929 = vunpack.c.h.b16 %v248
    %v930 = vunpack.c.l.b16 %v249
    %v931 = vunpack.c.h.b16 %v249
    %v932 = vunpack.c.l.b16 %v250
    %v933 = vunpack.c.h.b16 %v250
    %v934 = vunpack.c.l.b16 %v251
    %v935 = vunpack.c.h.b16 %v251
    %v936 = vunpack.c.l.b16 %v252
    %v937 = vunpack.c.h.b16 %v252
    %v938 = vunpack.c.l.b16 %v253
    %v939 = vunpack.c.h.b16 %v253
    %v940 = vunpack.c.l.b16 %v254
    %v941 = vunpack.c.h.b16 %v254
    %v942 = vunpack.c.l.b16 %v255
    %v943 = vunpack.c.h.b16 %v255
    %v944 = vunpack.c.l.b16 %v256
    %v945 = vunpack.c.h.b16 %v256
    %v946 = vunpack.c.l.b16 %v257
    %v947 = vunpack.c.h.b16 %v257
    %v948 = vunpack.c.l.b16 %v258
    %v949 = vunpack.c.h.b16 %v258
    %v950 = vunpack.c.l.b16 %v259
    %v951 = vunpack.c.h.b16 %v259
    %v952 = vunpack.c.l.b16 %v260
    %v953 = vunpack.c.h.b16 %v260
    %v954 = vunpack.c.l.b16 %v261
    %v955 = vunpack.c.h.b16 %v261
    %v956 = vunpack.c.l.b16 %v262
    %v957 = vunpack.c.h.b16 %v262
    %v958 = vunpack.c.l.b16 %v263
    %v959 = vunpack.c.h.b16 %v263
    %v960 = vunpack.c.l.b16 %v264
    %v961 = vunpack.c.h.b16 %v264
    %v962 = vunpack.c.l.b16 %v265
    %v963 = vunpack.c.h.b16 %v265
    %v964 = vunpack.c.l.b16 %v266
    %v965 = vunpack.c.h.b16 %v266
    %v966 = vunpack.c.l.b16 %v267
    %v967 = vunpack.c.h.b16 %v267
    %v968 = vunpack.c.l.b16 %v268
    %v969 = vunpack.c.h.b16 %v268
    %v970 = vunpack.c.l.b16 %v269
    %v971 = vunpack.c.h.b16 %v269
    %v972 = vunpack.c.l.b16 %v270
    %v973 = vunpack.c.h.b16 %v270
    %v974 = vunpack.c.l.b16 %v271
    %v975 = vunpack.c.h.b16 %v271
    %v976 = vunpack.c.l.b16 %v272
    %v977 = vunpack.c.h.b16 %v272
    %v978 = vunpack.c.l.b16 %v273
    %v979 = vunpack.c.h.b16 %v273
    %v980 = vunpack.c.l.b16 %v274
    %v981 = vunpack.c.h.b16 %v274
    %v982 = vunpack.c.l.b16 %v275
    %v983 = vunpack.c.h.b16 %v275
    %v984 = vunpack.c.l.b16 %v276
    %v985 = vunpack.c.h.b16 %v276
    %v986 = vunpack.c.l.b16 %v277
    %v987 = vunpack.c.h.b16 %v277
    %v988 = vunpack.c.l.b16 %v278
    %v989 = vunpack.c.h.b16 %v278
    %v990 = vunpack.c.l.b16 %v279
    %v991 = vunpack.c.h.b16 %v279
    %v992 = vunpack.c.l.b16 %v280
    %v993 = vunpack.c.h.b16 %v280
    %v994 = vunpack.c.l.b16 %v281
    %v995 = vunpack.c.h.b16 %v281
    %v996 = vunpack.c.l.b16 %v282
    %v997 = vunpack.c.h.b16 %v282
    %v998 = vunpack.c.l.b16 %v283
    %v999 = vunpack.c.h.b16 %v283
    %v1000 = vunpack.c.l.b16 %v284
    %v1001 = vunpack.c.h.b16 %v284
    %v1002 = vunpack.c.l.b16 %v285
    %v1003 = vunpack.c.h.b16 %v285
    %v1004 = vunpack.c.l.b16 %v286
    %v1005 = vunpack.c.h.b16 %v286
    %v1006 = vunpack.c.l.b16 %v287
    %v1007 = vunpack.c.h.b16 %v287
    %v1008 = vunpack.c.l.b16 %v288
    %v1009 = vunpack.c.h.b16 %v288
    %v1010 = vunpack.c.l.b16 %v289
    %v1011 = vunpack.c.h.b16 %v289
    %v1012 = vunpack.c.l.b16 %v290
    %v1013 = vunpack.c.h.b16 %v290
    %v1014 = vunpack.c.l.b16 %v291
    %v1015 = vunpack.c.h.b16 %v291
    %v1016 = vunpack.c.l.b16 %v292
    %v1017 = vunpack.c.h.b16 %v292
    %v1018 = vunpack.c.l.b16 %v293
    %v1019 = vunpack.c.h.b16 %v293
    %v1020 = vunpack.c.l.b16 %v294
    %v1021 = vunpack.c.h.b16 %v294
    %v1022 = vunpack.c.l.b16 %v295
    %v1023 = vunpack.c.h.b16 %v295
    %v1024 = vunpack.c.l.b16 %v296
    %v1025 = vunpack.c.h.b16 %v296
    %v1026 = vunpack.c.l.b16 %v297
    %v1027 = vunpack.c.h.b16 %v297
    %v1028 = vunpack.c.l.b16 %v298
    %v1029 = vunpack.c.h.b16 %v298
    %v1030 = vunpack.c.l.b16 %v299
    %v1031 = vunpack.c.h.b16 %v299
    %v1032 = vunpack.c.l.b16 %v300
    %v1033 = vunpack.c.h.b16 %v300
    %v1034 = vunpack.c.l.b16 %v301
    %v1035 = vunpack.c.h.b16 %v301
    %v1036 = vunpack.c.l.b16 %v302
    %v1037 = vunpack.c.h.b16 %v302
    %v1038 = vunpack.c.l.b16 %v303
    %v1039 = vunpack.c.h.b16 %v303
    %v1040 = vunpack.c.l.b16 %v304
    %v1041 = vunpack.c.h.b16 %v304
    %v1042 = vunpack.c.l.b16 %v305
    %v1043 = vunpack.c.h.b16 %v305
    %v1044 = vunpack.c.l.b16 %v306
    %v1045 = vunpack.c.h.b16 %v306
    %v1046 = vunpack.c.l.b16 %v307
    %v1047 = vunpack.c.h.b16 %v307
    %v1048 = vunpack.c.l.b16 %v308
    %v1049 = vunpack.c.h.b16 %v308
    %v1050 = vunpack.c.l.b16 %v309
    %v1051 = vunpack.c.h.b16 %v309
    %v1052 = vunpack.c.l.b16 %v310
    %v1053 = vunpack.c.h.b16 %v310
    %v1054 = vunpack.c.l.b16 %v311
    %v1055 = vunpack.c.h.b16 %v311
    %v1056 = vunpack.c.l.b16 %v312
    %v1057 = vunpack.c.h.b16 %v312
    %v1058 = vunpack.c.l.b16 %v313
    %v1059 = vunpack.c.h.b16 %v313
    %v1060 = vunpack.c.l.b16 %v314
    %v1061 = vunpack.c.h.b16 %v314
    %v1062 = vunpack.c.l.b16 %v315
    %v1063 = vunpack.c.h.b16 %v315
    %v1064 = vunpack.c.l.b16 %v316
    %v1065 = vunpack.c.h.b16 %v316
    %v1066 = vunpack.c.l.b16 %v317
    %v1067 = vunpack.c.h.b16 %v317
    %v1068 = vunpack.c.l.b16 %v318
    %v1069 = vunpack.c.h.b16 %v318
    %v1070 = vunpack.c.l.b16 %v319
    %v1071 = vunpack.c.h.b16 %v319
    %v1072 = vunpack.c.l.b16 %v320
    %v1073 = vunpack.c.h.b16 %v320
    %v1074 = vunpack.c.l.b16 %v321
    %v1075 = vunpack.c.h.b16 %v321
    %v1076 = vunpack.c.l.b16 %v322
    %v1077 = vunpack.c.h.b16 %v322
    %v1078 = vunpack.c.l.b16 %v323
    %v1079 = vunpack.c.h.b16 %v323
    %v1080 = vunpack.c.l.b16 %v324
    %v1081 = vunpack.c.h.b16 %v324
    %v1082 = vunpack.c.l.b16 %v325
    %v1083 = vunpack.c.h.b16 %v325
    %v1084 = vunpack.c.l.b16 %v326
    %v1085 = vunpack.c.h.b16 %v326
    %v1086 = vunpack.c.l.b16 %v327
    %v1087 = vunpack.c.h.b16 %v327
    %v1088 = vunpack.c.l.b16 %v328
    %v1089 = vunpack.c.h.b16 %v328
    %v1090 = vunpack.c.l.b16 %v329
    %v1091 = vunpack.c.h.b16 %v329
    %v1092 = vunpack.c.l.b16 %v330
    %v1093 = vunpack.c.h.b16 %v330
    %v1094 = vunpack.c.l.b16 %v331
    %v1095 = vunpack.c.h.b16 %v331
    %v1096 = vunpack.c.l.b16 %v332
    %v1097 = vunpack.c.h.b16 %v332
    %v1098 = vunpack.c.l.b16 %v333
    %v1099 = vunpack.c.h.b16 %v333
    %v1100 = vunpack.c.l.b16 %v334
    %v1101 = vunpack.c.h.b16 %v334
    %v1102 = vunpack.c.l.b16 %v335
    %v1103 = vunpack.c.h.b16 %v335
    %v1104 = vunpack.c.l.b16 %v336
    %v1105 = vunpack.c.h.b16 %v336
    %v1106 = vunpack.c.l.b16 %v337
    %v1107 = vunpack.c.h.b16 %v337
    %v1108 = vunpack.c.l.b16 %v338
    %v1109 = vunpack.c.h.b16 %v338
    %v1110 = vunpack.c.l.b16 %v339
    %v1111 = vunpack.c.h.b16 %v339
    %v1112 = vunpack.c.l.b16 %v340
    %v1113 = vunpack.c.h.b16 %v340
    %v1114 = vunpack.c.l.b16 %v341
    %v1115 = vunpack.c.h.b16 %v341
    %v1116 = vunpack.c.l.b16 %v342
    %v1117 = vunpack.c.h.b16 %v342
    %v1118 = vunpack.c.l.b16 %v343
    %v1119 = vunpack.c.h.b16 %v343
    %v1120 = vunpack.c.l.b16 %v344
    %v1121 = vunpack.c.h.b16 %v344
    %v1122 = vunpack.c.l.b16 %v345
    %v1123 = vunpack.c.h.b16 %v345
    %v1124 = vpack.c.b16 %v616, %v612
    %v1125 = vpack.c.b16 %v617, %v613
    %v1126 = vpack.c.b16 %v618, %v614
    %v1127 = vpack.c.b16 %v619, %v615
    %v1128 = vpack.c.b16 %v624, %v620
    %v1129 = vpack.c.b16 %v625, %v621
    %v1130 = vpack.c.b16 %v626, %v622
    %v1131 = vpack.c.b16 %v627, %v623
    %v1132 = vpack.c.b16 %v632, %v628
    %v1133 = vpack.c.b16 %v633, %v629
    %v1134 = vpack.c.b16 %v634, %v630
    %v1135 = vpack.c.b16 %v635, %v631
    %v1136 = vpack.c.b16 %v640, %v636
    %v1137 = vpack.c.b16 %v641, %v637
    %v1138 = vpack.c.b16 %v642, %v638
    %v1139 = vpack.c.b16 %v643, %v639
    %v1140 = vpack.c.b16 %v648, %v644
    %v1141 = vpack.c.b16 %v649, %v645
    %v1142 = vpack.c.b16 %v650, %v646
    %v1143 = vpack.c.b16 %v651, %v647
    %v1144 = vpack.c.b16 %v656, %v652
    %v1145 = vpack.c.b16 %v657, %v653
    %v1146 = vpack.c.b16 %v658, %v654
    %v1147 = vpack.c.b16 %v659, %v655
    %v1148 = vpack.c.b16 %v664, %v660
    %v1149 = vpack.c.b16 %v665, %v661
    %v1150 = vpack.c.b16 %v666, %v662
    %v1151 = vpack.c.b16 %v667, %v663
    %v1152 = vpack.c.b16 %v672, %v668
    %v1153 = vpack.c.b16 %v673, %v669
    %v1154 = vpack.c.b16 %v674, %v670
    %v1155 = vpack.c.b16 %v675, %v671
    %v1156 = vpack.c.b16 %v680, %v676
    %v1157 = vpack.c.b16 %v681, %v677
    %v1158 = vpack.c.b16 %v682, %v678
    %v1159 = vpack.c.b16 %v683, %v679
    %v1160 = vpack.c.b16 %v688, %v684
    %v1161 = vpack.c.b16 %v689, %v685
    %v1162 = vpack.c.b16 %v690, %v686
    %v1163 = vpack.c.b16 %v691, %v687
    %v1164 = vpack.c.b16 %v696, %v692
    %v1165 = vpack.c.b16 %v697, %v693
    %v1166 = vpack.c.b16 %v698, %v694
    %v1167 = vpack.c.b16 %v699, %v695
    %v1168 = vpack.c.b16 %v704, %v700
    %v1169 = vpack.c.b16 %v705, %v701
    %v1170 = vpack.c.b16 %v706, %v702
    %v1171 = vpack.c.b16 %v707, %v703
    %v1172 = vpack.c.b16 %v712, %v708
    %v1173 = vpack.c.b16 %v713, %v709
    %v1174 = vpack.c.b16 %v714, %v710
    %v1175 = vpack.c.b16 %v715, %v711
    %v1176 = vpack.c.b16 %v720, %v716
    %v1177 = vpack.c.b16 %v721, %v717
    %v1178 = vpack.c.b16 %v722, %v718
    %v1179 = vpack.c.b16 %v723, %v719
    %v1180 = vpack.c.b16 %v728, %v724
    %v1181 = vpack.c.b16 %v729, %v725
    %v1182 = vpack.c.b16 %v730, %v726
    %v1183 = vpack.c.b16 %v731, %v727
    %v1184 = vpack.c.b16 %v736, %v732
    %v1185 = vpack.c.b16 %v737, %v733
    %v1186 = vpack.c.b16 %v738, %v734
    %v1187 = vpack.c.b16 %v739, %v735
    %v1188 = vpack.c.b16 %v744, %v740
    %v1189 = vpack.c.b16 %v745, %v741
    %v1190 = vpack.c.b16 %v746, %v742
    %v1191 = vpack.c.b16 %v747, %v743
    %v1192 = vpack.c.b16 %v752, %v748
    %v1193 = vpack.c.b16 %v753, %v749
    %v1194 = vpack.c.b16 %v754, %v750
    %v1195 = vpack.c.b16 %v755, %v751
    %v1196 = vpack.c.b16 %v760, %v756
    %v1197 = vpack.c.b16 %v761, %v757
    %v1198 = vpack.c.b16 %v762, %v758
    %v1199 = vpack.c.b16 %v763, %v759
    %v1200 = vpack.c.b16 %v768, %v764
    %v1201 = vpack.c.b16 %v769, %v765
    %v1202 = vpack.c.b16 %v770, %v766
    %v1203 = vpack.c.b16 %v771, %v767
    %v1204 = vpack.c.b16 %v776, %v772
    %v1205 = vpack.c.b16 %v777, %v773
    %v1206 = vpack.c.b16 %v778, %v774
    %v1207 = vpack.c.b16 %v779, %v775
    %v1208 = vpack.c.b16 %v784, %v780
    %v1209 = vpack.c.b16 %v785, %v781
    %v1210 = vpack.c.b16 %v786, %v782
    %v1211 = vpack.c.b16 %v787, %v783
    %v1212 = vpack.c.b16 %v792, %v788
    %v1213 = vpack.c.b16 %v793, %v789
    %v1214 = vpack.c.b16 %v794, %v790
    %v1215 = vpack.c.b16 %v795, %v791
    %v1216 = vpack.c.b16 %v800, %v796
    %v1217 = vpack.c.b16 %v801, %v797
    %v1218 = vpack.c.b16 %v802, %v798
    %v1219 = vpack.c.b16 %v803, %v799
    %v1220 = vpack.c.b16 %v808, %v804
    %v1221 = vpack.c.b16 %v809, %v805
    %v1222 = vpack.c.b16 %v810, %v806
    %v1223 = vpack.c.b16 %v811, %v807
    %v1224 = vpack.c.b16 %v816, %v812
    %v1225 = vpack.c.b16 %v817, %v813
    %v1226 = vpack.c.b16 %v818, %v814
    %v1227 = vpack.c.b16 %v819, %v815
    %v1228 = vpack.c.b16 %v824, %v820
    %v1229 = vpack.c.b16 %v825, %v821
    %v1230 = vpack.c.b16 %v826, %v822
    %v1231 = vpack.c.b16 %v827, %v823
    %v1232 = vpack.c.b16 %v832, %v828
    %v1233 = vpack.c.b16 %v833, %v829
    %v1234 = vpack.c.b16 %v834, %v830
    %v1235 = vpack.c.b16 %v835, %v831
    %v1236 = vpack.c.b16 %v840, %v836
    %v1237 = vpack.c.b16 %v841, %v837
    %v1238 = vpack.c.b16 %v842, %v838
    %v1239 = vpack.c.b16 %v843, %v839
    %v1240 = vpack.c.b16 %v848, %v844
    %v1241 = vpack.c.b16 %v849, %v845
    %v1242 = vpack.c.b16 %v850, %v846
    %v1243 = vpack.c.b16 %v851, %v847
    %v1244 = vpack.c.b16 %v856, %v852
    %v1245 = vpack.c.b16 %v857, %v853
    %v1246 = vpack.c.b16 %v858, %v854
    %v1247 = vpack.c.b16 %v859, %v855
    %v1248 = vpack.c.b16 %v864, %v860
    %v1249 = vpack.c.b16 %v865, %v861
    %v1250 = vpack.c.b16 %v866, %v862
    %v1251 = vpack.c.b16 %v867, %v863
    %v1252 = vpack.c.b16 %v872, %v868
    %v1253 = vpack.c.b16 %v873, %v869
    %v1254 = vpack.c.b16 %v874, %v870
    %v1255 = vpack.c.b16 %v875, %v871
    %v1256 = vpack.c.b16 %v880, %v876
    %v1257 = vpack.c.b16 %v881, %v877
    %v1258 = vpack.c.b16 %v882, %v878
    %v1259 = vpack.c.b16 %v883, %v879
    %v1260 = vpack.c.b16 %v888, %v884
    %v1261 = vpack.c.b16 %v889, %v885
    %v1262 = vpack.c.b16 %v890, %v886
    %v1263 = vpack.c.b16 %v891, %v887
    %v1264 = vpack.c.b16 %v896, %v892
    %v1265 = vpack.c.b16 %v897, %v893
    %v1266 = vpack.c.b16 %v898, %v894
    %v1267 = vpack.c.b16 %v899, %v895
    %v1268 = vpack.c.b16 %v904, %v900
    %v1269 = vpack.c.b16 %v905, %v901
    %v1270 = vpack.c.b16 %v906, %v902
    %v1271 = vpack.c.b16 %v907, %v903
    %v1272 = vpack.c.b16 %v912, %v908
    %v1273 = vpack.c.b16 %v913, %v909
    %v1274 = vpack.c.b16 %v914, %v910
    %v1275 = vpack.c.b16 %v915, %v911
    %v1276 = vpack.c.b16 %v920, %v916
    %v1277 = vpack.c.b16 %v921, %v917
    %v1278 = vpack.c.b16 %v922, %v918
    %v1279 = vpack.c.b16 %v923, %v919
    %v1280 = vpack.c.b16 %v928, %v924
    %v1281 = vpack.c.b16 %v929, %v925
    %v1282 = vpack.c.b16 %v930, %v926
    %v1283 = vpack.c.b16 %v931, %v927
    %v1284 = vpack.c.b16 %v936, %v932
    %v1285 = vpack.c.b16 %v937, %v933
    %v1286 = vpack.c.b16 %v938, %v934
    %v1287 = vpack.c.b16 %v939, %v935
    %v1288 = vpack.c.b16 %v944, %v940
    %v1289 = vpack.c.b16 %v945, %v941
    %v1290 = vpack.c.b16 %v946, %v942
    %v1291 = vpack.c.b16 %v947, %v943
    %v1292 = vpack.c.b16 %v952, %v948
    %v1293 = vpack.c.b16 %v953, %v949
    %v1294 = vpack.c.b16 %v954, %v950
    %v1295 = vpack.c.b16 %v955, %v951
    %v1296 = vpack.c.b16 %v960, %v956
    %v1297 = vpack.c.b16 %v961, %v957
    %v1298 = vpack.c.b16 %v962, %v958
    %v1299 = vpack.c.b16 %v963, %v959
    %v1300 = vpack.c.b16 %v968, %v964
    %v1301 = vpack.c.b16 %v969, %v965
    %v1302 = vpack.c.b16 %v970, %v966
    %v1303 = vpack.c.b16 %v971, %v967
    %v1304 = vpack.c.b16 %v976, %v972
    %v1305 = vpack.c.b16 %v977, %v973
    %v1306 = vpack.c.b16 %v978, %v974
    %v1307 = vpack.c.b16 %v979, %v975
    %v1308 = vpack.c.b16 %v984, %v980
    %v1309 = vpack.c.b16 %v985, %v981
    %v1310 = vpack.c.b16 %v986, %v982
    %v1311 = vpack.c.b16 %v987, %v983
    %v1312 = vpack.c.b16 %v992, %v988
    %v1313 = vpack.c.b16 %v993, %v989
    %v1314 = vpack.c.b16 %v994, %v990
    %v1315 = vpack.c.b16 %v995, %v991
    %v1316 = vpack.c.b16 %v1000, %v996
    %v1317 = vpack.c.b16 %v1001, %v997
    %v1318 = vpack.c.b16 %v1002, %v998
    %v1319 = vpack.c.b16 %v1003, %v999
    %v1320 = vpack.c.b16 %v1008, %v1004
    %v1321 = vpack.c.b16 %v1009, %v1005
    %v1322 = vpack.c.b16 %v1010, %v1006
    %v1323 = vpack.c.b16 %v1011, %v1007
    %v1324 = vpack.c.b16 %v1016, %v1012
    %v1325 = vpack.c.b16 %v1017, %v1013
    %v1326 = vpack.c.b16 %v1018, %v1014
    %v1327 = vpack.c.b16 %v1019, %v1015
    %v1328 = vpack.c.b16 %v1024, %v1020
    %v1329 = vpack.c.b16 %v1025, %v1021
    %v1330 = vpack.c.b16 %v1026, %v1022
    %v1331 = vpack.c.b16 %v1027, %v1023
    %v1332 = vpack.c.b16 %v1032, %v1028
    %v1333 = vpack.c.b16 %v1033, %v1029
    %v1334 = vpack.c.b16 %v1034, %v1030
    %v1335 = vpack.c.b16 %v1035, %v1031
    %v1336 = vpack.c.b16 %v1040, %v1036
    %v1337 = vpack.c.b16 %v1041, %v1037
    %v1338 = vpack.c.b16 %v1042, %v1038
    %v1339 = vpack.c.b16 %v1043, %v1039
    %v1340 = vpack.c.b16 %v1048, %v1044
    %v1341 = vpack.c.b16 %v1049, %v1045
    %v1342 = vpack.c.b16 %v1050, %v1046
    %v1343 = vpack.c.b16 %v1051, %v1047
    %v1344 = vpack.c.b16 %v1056, %v1052
    %v1345 = vpack.c.b16 %v1057, %v1053
    %v1346 = vpack.c.b16 %v1058, %v1054
    %v1347 = vpack.c.b16 %v1059, %v1055
    %v1348 = vpack.c.b16 %v1064, %v1060
    %v1349 = vpack.c.b16 %v1065, %v1061
    %v1350 = vpack.c.b16 %v1066, %v1062
    %v1351 = vpack.c.b16 %v1067, %v1063
    %v1352 = vpack.c.b16 %v1072, %v1068
    %v1353 = vpack.c.b16 %v1073, %v1069
    %v1354 = vpack.c.b16 %v1074, %v1070
    %v1355 = vpack.c.b16 %v1075, %v1071
    %v1356 = vpack.c.b16 %v1080, %v1076
    %v1357 = vpack.c.b16 %v1081, %v1077
    %v1358 = vpack.c.b16 %v1082, %v1078
    %v1359 = vpack.c.b16 %v1083, %v1079
    %v1360 = vpack.c.b16 %v1088, %v1084
    %v1361 = vpack.c.b16 %v1089, %v1085
    %v1362 = vpack.c.b16 %v1090, %v1086
    %v1363 = vpack.c.b16 %v1091, %v1087
    %v1364 = vpack.c.b16 %v1096, %v1092
    %v1365 = vpack.c.b16 %v1097, %v1093
    %v1366 = vpack.c.b16 %v1098, %v1094
    %v1367 = vpack.c.b16 %v1099, %v1095
    %v1368 = vpack.c.b16 %v1104, %v1100
    %v1369 = vpack.c.b16 %v1105, %v1101
    %v1370 = vpack.c.b16 %v1106, %v1102
    %v1371 = vpack.c.b16 %v1107, %v1103
    %v1372 = vpack.c.b16 %v1112, %v1108
    %v1373 = vpack.c.b16 %v1113, %v1109
    %v1374 = vpack.c.b16 %v1114, %v1110
    %v1375 = vpack.c.b16 %v1115, %v1111
    %v1376 = vpack.c.b16 %v1120, %v1116
    %v1377 = vpack.c.b16 %v1121, %v1117
    %v1378 = vpack.c.b16 %v1122, %v1118
    %v1379 = vpack.c.b16 %v1123, %v1119
    %1636 = vmatpush.bf16.msra.mxu0 %v1152
    %1637 = vmatpush.bf16.msra.mxu0 %v1148
    %1638 = vmatpush.bf16.msra.mxu0 %v1144
    %1639 = vmatpush.bf16.msra.mxu0 %v1140
    %1640 = vmatpush.bf16.msra.mxu0 %v1136
    %1641 = vmatpush.bf16.msra.mxu0 %v1132
    %1642 = vmatpush.bf16.msra.mxu0 %v1128
    %1643 = vmatpush.bf16.msra.mxu0 %v1124
    %1644 = vmatmul.bf16.gmra.mxu0 %v82
    %v1645 = vpop.f32.mrf.mxu0
    %v1646 = vadd.f32 %v348, %v1645
    %v1647 = vpop.f32.mrf.mxu0
    %1648 = vdwg.mxu0
    %1649 = vmatpush.bf16.msra.mxu0 %v1184
    %1650 = vmatpush.bf16.msra.mxu0 %v1180
    %1651 = vmatpush.bf16.msra.mxu0 %v1176
    %1652 = vmatpush.bf16.msra.mxu0 %v1172
    %1653 = vmatpush.bf16.msra.mxu0 %v1168
    %1654 = vmatpush.bf16.msra.mxu0 %v1164
    %1655 = vmatpush.bf16.msra.mxu0 %v1160
    %1656 = vmatpush.bf16.msra.mxu0 %v1156
    %1657 = vmatmul.bf16.gmra.mxu0 %v83
    %v1658 = vpop.f32.mrf.mxu0
    %v1659 = vadd.f32 %v1646, %v1658
    %v1660 = vpop.f32.mrf.mxu0
    %1661 = vdwg.mxu0
    %1662 = vmatpush.bf16.msra.mxu0 %v1216
    %1663 = vmatpush.bf16.msra.mxu0 %v1212
    %1664 = vmatpush.bf16.msra.mxu0 %v1208
    %1665 = vmatpush.bf16.msra.mxu0 %v1204
    %1666 = vmatpush.bf16.msra.mxu0 %v1200
    %1667 = vmatpush.bf16.msra.mxu0 %v1196
    %1668 = vmatpush.bf16.msra.mxu0 %v1192
    %1669 = vmatpush.bf16.msra.mxu0 %v1188
    %1670 = vmatmul.bf16.gmra.mxu0 %v84
    %v1671 = vpop.f32.mrf.mxu0
    %v1672 = vadd.f32 %v1659, %v1671
    %v1673 = vpop.f32.mrf.mxu0
    %1674 = vdwg.mxu0
    %1675 = vmatpush.bf16.msra.mxu0 %v1248
    %1676 = vmatpush.bf16.msra.mxu0 %v1244
    %1677 = vmatpush.bf16.msra.mxu0 %v1240
    %1678 = vmatpush.bf16.msra.mxu0 %v1236
    %1679 = vmatpush.bf16.msra.mxu0 %v1232
    %1680 = vmatpush.bf16.msra.mxu0 %v1228
    %1681 = vmatpush.bf16.msra.mxu0 %v1224
    %1682 = vmatpush.bf16.msra.mxu0 %v1220
    %1683 = vmatmul.bf16.gmra.mxu0 %v85
    %v1684 = vpop.f32.mrf.mxu0
    %v1685 = vadd.f32 %v1672, %v1684
    %v1686 = vpop.f32.mrf.mxu0
    %1687 = vdwg.mxu0
    %1688 = vmatpush.bf16.msra.mxu0 %v1280
    %1689 = vmatpush.bf16.msra.mxu0 %v1276
    %1690 = vmatpush.bf16.msra.mxu0 %v1272
    %1691 = vmatpush.bf16.msra.mxu0 %v1268
    %1692 = vmatpush.bf16.msra.mxu0 %v1264
    %1693 = vmatpush.bf16.msra.mxu0 %v1260
    %1694 = vmatpush.bf16.msra.mxu0 %v1256
    %1695 = vmatpush.bf16.msra.mxu0 %v1252
    %1696 = vmatmul.bf16.gmra.mxu0 %v86
    %v1697 = vpop.f32.mrf.mxu0
    %v1698 = vadd.f32 %v1685, %v1697
    %v1699 = vpop.f32.mrf.mxu0
    %1700 = vdwg.mxu0
    %1701 = vmatpush.bf16.msra.mxu0 %v1312
    %1702 = vmatpush.bf16.msra.mxu0 %v1308
    %1703 = vmatpush.bf16.msra.mxu0 %v1304
    %1704 = vmatpush.bf16.msra.mxu0 %v1300
    %1705 = vmatpush.bf16.msra.mxu0 %v1296
    %1706 = vmatpush.bf16.msra.mxu0 %v1292
    %1707 = vmatpush.bf16.msra.mxu0 %v1288
    %1708 = vmatpush.bf16.msra.mxu0 %v1284
    %1709 = vmatmul.bf16.gmra.mxu0 %v87
    %v1710 = vpop.f32.mrf.mxu0
    %v1711 = vadd.f32 %v1698, %v1710
    %v1712 = vpop.f32.mrf.mxu0
    %1713 = vdwg.mxu0
    %1714 = vmatpush.bf16.msra.mxu0 %v1344
    %1715 = vmatpush.bf16.msra.mxu0 %v1340
    %1716 = vmatpush.bf16.msra.mxu0 %v1336
    %1717 = vmatpush.bf16.msra.mxu0 %v1332
    %1718 = vmatpush.bf16.msra.mxu0 %v1328
    %1719 = vmatpush.bf16.msra.mxu0 %v1324
    %1720 = vmatpush.bf16.msra.mxu0 %v1320
    %1721 = vmatpush.bf16.msra.mxu0 %v1316
    %1722 = vmatmul.bf16.gmra.mxu0 %v88
    %v1723 = vpop.f32.mrf.mxu0
    %v1724 = vadd.f32 %v1711, %v1723
    %v1725 = vpop.f32.mrf.mxu0
    %1726 = vdwg.mxu0
    %1727 = vmatpush.bf16.msra.mxu0 %v1376
    %1728 = vmatpush.bf16.msra.mxu0 %v1372
    %1729 = vmatpush.bf16.msra.mxu0 %v1368
    %1730 = vmatpush.bf16.msra.mxu0 %v1364
    %1731 = vmatpush.bf16.msra.mxu0 %v1360
    %1732 = vmatpush.bf16.msra.mxu0 %v1356
    %1733 = vmatpush.bf16.msra.mxu0 %v1352
    %1734 = vmatpush.bf16.msra.mxu0 %v1348
    %1735 = vmatmul.bf16.gmra.mxu0 %v89
    %v1736 = vpop.f32.mrf.mxu0
    %v1737 = vadd.f32 %v1724, %v1736
    %v1738 = vpop.f32.mrf.mxu0
    %1739 = vdwg.mxu0
    %1740 = vmatpush.bf16.msra.mxu0 %v1153
    %1741 = vmatpush.bf16.msra.mxu0 %v1149
    %1742 = vmatpush.bf16.msra.mxu0 %v1145
    %1743 = vmatpush.bf16.msra.mxu0 %v1141
    %1744 = vmatpush.bf16.msra.mxu0 %v1137
    %1745 = vmatpush.bf16.msra.mxu0 %v1133
    %1746 = vmatpush.bf16.msra.mxu0 %v1129
    %1747 = vmatpush.bf16.msra.mxu0 %v1125
    %1748 = vmatmul.bf16.gmra.mxu0 %v82
    %v1749 = vpop.f32.mrf.mxu0
    %v1750 = vadd.f32 %v349, %v1749
    %v1751 = vpop.f32.mrf.mxu0
    %1752 = vdwg.mxu0
    %1753 = vmatpush.bf16.msra.mxu0 %v1185
    %1754 = vmatpush.bf16.msra.mxu0 %v1181
    %1755 = vmatpush.bf16.msra.mxu0 %v1177
    %1756 = vmatpush.bf16.msra.mxu0 %v1173
    %1757 = vmatpush.bf16.msra.mxu0 %v1169
    %1758 = vmatpush.bf16.msra.mxu0 %v1165
    %1759 = vmatpush.bf16.msra.mxu0 %v1161
    %1760 = vmatpush.bf16.msra.mxu0 %v1157
    %1761 = vmatmul.bf16.gmra.mxu0 %v83
    %v1762 = vpop.f32.mrf.mxu0
    %v1763 = vadd.f32 %v1750, %v1762
    %v1764 = vpop.f32.mrf.mxu0
    %1765 = vdwg.mxu0
    %1766 = vmatpush.bf16.msra.mxu0 %v1217
    %1767 = vmatpush.bf16.msra.mxu0 %v1213
    %1768 = vmatpush.bf16.msra.mxu0 %v1209
    %1769 = vmatpush.bf16.msra.mxu0 %v1205
    %1770 = vmatpush.bf16.msra.mxu0 %v1201
    %1771 = vmatpush.bf16.msra.mxu0 %v1197
    %1772 = vmatpush.bf16.msra.mxu0 %v1193
    %1773 = vmatpush.bf16.msra.mxu0 %v1189
    %1774 = vmatmul.bf16.gmra.mxu0 %v84
    %v1775 = vpop.f32.mrf.mxu0
    %v1776 = vadd.f32 %v1763, %v1775
    %v1777 = vpop.f32.mrf.mxu0
    %1778 = vdwg.mxu0
    %1779 = vmatpush.bf16.msra.mxu0 %v1249
    %1780 = vmatpush.bf16.msra.mxu0 %v1245
    %1781 = vmatpush.bf16.msra.mxu0 %v1241
    %1782 = vmatpush.bf16.msra.mxu0 %v1237
    %1783 = vmatpush.bf16.msra.mxu0 %v1233
    %1784 = vmatpush.bf16.msra.mxu0 %v1229
    %1785 = vmatpush.bf16.msra.mxu0 %v1225
    %1786 = vmatpush.bf16.msra.mxu0 %v1221
    %1787 = vmatmul.bf16.gmra.mxu0 %v85
    %v1788 = vpop.f32.mrf.mxu0
    %v1789 = vadd.f32 %v1776, %v1788
    %v1790 = vpop.f32.mrf.mxu0
    %1791 = vdwg.mxu0
    %1792 = vmatpush.bf16.msra.mxu0 %v1281
    %1793 = vmatpush.bf16.msra.mxu0 %v1277
    %1794 = vmatpush.bf16.msra.mxu0 %v1273
    %1795 = vmatpush.bf16.msra.mxu0 %v1269
    %1796 = vmatpush.bf16.msra.mxu0 %v1265
    %1797 = vmatpush.bf16.msra.mxu0 %v1261
    %1798 = vmatpush.bf16.msra.mxu0 %v1257
    %1799 = vmatpush.bf16.msra.mxu0 %v1253
    %1800 = vmatmul.bf16.gmra.mxu0 %v86
    %v1801 = vpop.f32.mrf.mxu0
    %v1802 = vadd.f32 %v1789, %v1801
    %v1803 = vpop.f32.mrf.mxu0
    %1804 = vdwg.mxu0
    %1805 = vmatpush.bf16.msra.mxu0 %v1313
    %1806 = vmatpush.bf16.msra.mxu0 %v1309
    %1807 = vmatpush.bf16.msra.mxu0 %v1305
    %1808 = vmatpush.bf16.msra.mxu0 %v1301
    %1809 = vmatpush.bf16.msra.mxu0 %v1297
    %1810 = vmatpush.bf16.msra.mxu0 %v1293
    %1811 = vmatpush.bf16.msra.mxu0 %v1289
    %1812 = vmatpush.bf16.msra.mxu0 %v1285
    %1813 = vmatmul.bf16.gmra.mxu0 %v87
    %v1814 = vpop.f32.mrf.mxu0
    %v1815 = vadd.f32 %v1802, %v1814
    %v1816 = vpop.f32.mrf.mxu0
    %1817 = vdwg.mxu0
    %1818 = vmatpush.bf16.msra.mxu0 %v1345
    %1819 = vmatpush.bf16.msra.mxu0 %v1341
    %1820 = vmatpush.bf16.msra.mxu0 %v1337
    %1821 = vmatpush.bf16.msra.mxu0 %v1333
    %1822 = vmatpush.bf16.msra.mxu0 %v1329
    %1823 = vmatpush.bf16.msra.mxu0 %v1325
    %1824 = vmatpush.bf16.msra.mxu0 %v1321
    %1825 = vmatpush.bf16.msra.mxu0 %v1317
    %1826 = vmatmul.bf16.gmra.mxu0 %v88
    %v1827 = vpop.f32.mrf.mxu0
    %v1828 = vadd.f32 %v1815, %v1827
    %v1829 = vpop.f32.mrf.mxu0
    %1830 = vdwg.mxu0
    %1831 = vmatpush.bf16.msra.mxu0 %v1377
    %1832 = vmatpush.bf16.msra.mxu0 %v1373
    %1833 = vmatpush.bf16.msra.mxu0 %v1369
    %1834 = vmatpush.bf16.msra.mxu0 %v1365
    %1835 = vmatpush.bf16.msra.mxu0 %v1361
    %1836 = vmatpush.bf16.msra.mxu0 %v1357
    %1837 = vmatpush.bf16.msra.mxu0 %v1353
    %1838 = vmatpush.bf16.msra.mxu0 %v1349
    %1839 = vmatmul.bf16.gmra.mxu0 %v89
    %v1840 = vpop.f32.mrf.mxu0
    %v1841 = vadd.f32 %v1828, %v1840
    %v1842 = vpop.f32.mrf.mxu0
    %1843 = vdwg.mxu0
    %1844 = vmatpush.bf16.msra.mxu0 %v1154
    %1845 = vmatpush.bf16.msra.mxu0 %v1150
    %1846 = vmatpush.bf16.msra.mxu0 %v1146
    %1847 = vmatpush.bf16.msra.mxu0 %v1142
    %1848 = vmatpush.bf16.msra.mxu0 %v1138
    %1849 = vmatpush.bf16.msra.mxu0 %v1134
    %1850 = vmatpush.bf16.msra.mxu0 %v1130
    %1851 = vmatpush.bf16.msra.mxu0 %v1126
    %1852 = vmatmul.bf16.gmra.mxu0 %v82
    %v1853 = vpop.f32.mrf.mxu0
    %v1854 = vadd.f32 %v350, %v1853
    %v1855 = vpop.f32.mrf.mxu0
    %1856 = vdwg.mxu0
    %1857 = vmatpush.bf16.msra.mxu0 %v1186
    %1858 = vmatpush.bf16.msra.mxu0 %v1182
    %1859 = vmatpush.bf16.msra.mxu0 %v1178
    %1860 = vmatpush.bf16.msra.mxu0 %v1174
    %1861 = vmatpush.bf16.msra.mxu0 %v1170
    %1862 = vmatpush.bf16.msra.mxu0 %v1166
    %1863 = vmatpush.bf16.msra.mxu0 %v1162
    %1864 = vmatpush.bf16.msra.mxu0 %v1158
    %1865 = vmatmul.bf16.gmra.mxu0 %v83
    %v1866 = vpop.f32.mrf.mxu0
    %v1867 = vadd.f32 %v1854, %v1866
    %v1868 = vpop.f32.mrf.mxu0
    %1869 = vdwg.mxu0
    %1870 = vmatpush.bf16.msra.mxu0 %v1218
    %1871 = vmatpush.bf16.msra.mxu0 %v1214
    %1872 = vmatpush.bf16.msra.mxu0 %v1210
    %1873 = vmatpush.bf16.msra.mxu0 %v1206
    %1874 = vmatpush.bf16.msra.mxu0 %v1202
    %1875 = vmatpush.bf16.msra.mxu0 %v1198
    %1876 = vmatpush.bf16.msra.mxu0 %v1194
    %1877 = vmatpush.bf16.msra.mxu0 %v1190
    %1878 = vmatmul.bf16.gmra.mxu0 %v84
    %v1879 = vpop.f32.mrf.mxu0
    %v1880 = vadd.f32 %v1867, %v1879
    %v1881 = vpop.f32.mrf.mxu0
    %1882 = vdwg.mxu0
    %1883 = vmatpush.bf16.msra.mxu0 %v1250
    %1884 = vmatpush.bf16.msra.mxu0 %v1246
    %1885 = vmatpush.bf16.msra.mxu0 %v1242
    %1886 = vmatpush.bf16.msra.mxu0 %v1238
    %1887 = vmatpush.bf16.msra.mxu0 %v1234
    %1888 = vmatpush.bf16.msra.mxu0 %v1230
    %1889 = vmatpush.bf16.msra.mxu0 %v1226
    %1890 = vmatpush.bf16.msra.mxu0 %v1222
    %1891 = vmatmul.bf16.gmra.mxu0 %v85
    %v1892 = vpop.f32.mrf.mxu0
    %v1893 = vadd.f32 %v1880, %v1892
    %v1894 = vpop.f32.mrf.mxu0
    %1895 = vdwg.mxu0
    %1896 = vmatpush.bf16.msra.mxu0 %v1282
    %1897 = vmatpush.bf16.msra.mxu0 %v1278
    %1898 = vmatpush.bf16.msra.mxu0 %v1274
    %1899 = vmatpush.bf16.msra.mxu0 %v1270
    %1900 = vmatpush.bf16.msra.mxu0 %v1266
    %1901 = vmatpush.bf16.msra.mxu0 %v1262
    %1902 = vmatpush.bf16.msra.mxu0 %v1258
    %1903 = vmatpush.bf16.msra.mxu0 %v1254
    %1904 = vmatmul.bf16.gmra.mxu0 %v86
    %v1905 = vpop.f32.mrf.mxu0
    %v1906 = vadd.f32 %v1893, %v1905
    %v1907 = vpop.f32.mrf.mxu0
    %1908 = vdwg.mxu0
    %1909 = vmatpush.bf16.msra.mxu0 %v1314
    %1910 = vmatpush.bf16.msra.mxu0 %v1310
    %1911 = vmatpush.bf16.msra.mxu0 %v1306
    %1912 = vmatpush.bf16.msra.mxu0 %v1302
    %1913 = vmatpush.bf16.msra.mxu0 %v1298
    %1914 = vmatpush.bf16.msra.mxu0 %v1294
    %1915 = vmatpush.bf16.msra.mxu0 %v1290
    %1916 = vmatpush.bf16.msra.mxu0 %v1286
    %1917 = vmatmul.bf16.gmra.mxu0 %v87
    %v1918 = vpop.f32.mrf.mxu0
    %v1919 = vadd.f32 %v1906, %v1918
    %v1920 = vpop.f32.mrf.mxu0
    %1921 = vdwg.mxu0
    %1922 = vmatpush.bf16.msra.mxu0 %v1346
    %1923 = vmatpush.bf16.msra.mxu0 %v1342
    %1924 = vmatpush.bf16.msra.mxu0 %v1338
    %1925 = vmatpush.bf16.msra.mxu0 %v1334
    %1926 = vmatpush.bf16.msra.mxu0 %v1330
    %1927 = vmatpush.bf16.msra.mxu0 %v1326
    %1928 = vmatpush.bf16.msra.mxu0 %v1322
    %1929 = vmatpush.bf16.msra.mxu0 %v1318
    %1930 = vmatmul.bf16.gmra.mxu0 %v88
    %v1931 = vpop.f32.mrf.mxu0
    %v1932 = vadd.f32 %v1919, %v1931
    %v1933 = vpop.f32.mrf.mxu0
    %1934 = vdwg.mxu0
    %1935 = vmatpush.bf16.msra.mxu0 %v1378
    %1936 = vmatpush.bf16.msra.mxu0 %v1374
    %1937 = vmatpush.bf16.msra.mxu0 %v1370
    %1938 = vmatpush.bf16.msra.mxu0 %v1366
    %1939 = vmatpush.bf16.msra.mxu0 %v1362
    %1940 = vmatpush.bf16.msra.mxu0 %v1358
    %1941 = vmatpush.bf16.msra.mxu0 %v1354
    %1942 = vmatpush.bf16.msra.mxu0 %v1350
    %1943 = vmatmul.bf16.gmra.mxu0 %v89
    %v1944 = vpop.f32.mrf.mxu0
    %v1945 = vadd.f32 %v1932, %v1944
    %v1946 = vpop.f32.mrf.mxu0
    %1947 = vdwg.mxu0
    %1948 = vmatpush.bf16.msra.mxu0 %v1155
    %1949 = vmatpush.bf16.msra.mxu0 %v1151
    %1950 = vmatpush.bf16.msra.mxu0 %v1147
    %1951 = vmatpush.bf16.msra.mxu0 %v1143
    %1952 = vmatpush.bf16.msra.mxu0 %v1139
    %1953 = vmatpush.bf16.msra.mxu0 %v1135
    %1954 = vmatpush.bf16.msra.mxu0 %v1131
    %1955 = vmatpush.bf16.msra.mxu0 %v1127
    %1956 = vmatmul.bf16.gmra.mxu0 %v82
    %v1957 = vpop.f32.mrf.mxu0
    %v1958 = vadd.f32 %v351, %v1957
    %v1959 = vpop.f32.mrf.mxu0
    %1960 = vdwg.mxu0
    %1961 = vmatpush.bf16.msra.mxu0 %v1187
    %1962 = vmatpush.bf16.msra.mxu0 %v1183
    %1963 = vmatpush.bf16.msra.mxu0 %v1179
    %1964 = vmatpush.bf16.msra.mxu0 %v1175
    %1965 = vmatpush.bf16.msra.mxu0 %v1171
    %1966 = vmatpush.bf16.msra.mxu0 %v1167
    %1967 = vmatpush.bf16.msra.mxu0 %v1163
    %1968 = vmatpush.bf16.msra.mxu0 %v1159
    %1969 = vmatmul.bf16.gmra.mxu0 %v83
    %v1970 = vpop.f32.mrf.mxu0
    %v1971 = vadd.f32 %v1958, %v1970
    %v1972 = vpop.f32.mrf.mxu0
    %1973 = vdwg.mxu0
    %1974 = vmatpush.bf16.msra.mxu0 %v1219
    %1975 = vmatpush.bf16.msra.mxu0 %v1215
    %1976 = vmatpush.bf16.msra.mxu0 %v1211
    %1977 = vmatpush.bf16.msra.mxu0 %v1207
    %1978 = vmatpush.bf16.msra.mxu0 %v1203
    %1979 = vmatpush.bf16.msra.mxu0 %v1199
    %1980 = vmatpush.bf16.msra.mxu0 %v1195
    %1981 = vmatpush.bf16.msra.mxu0 %v1191
    %1982 = vmatmul.bf16.gmra.mxu0 %v84
    %v1983 = vpop.f32.mrf.mxu0
    %v1984 = vadd.f32 %v1971, %v1983
    %v1985 = vpop.f32.mrf.mxu0
    %1986 = vdwg.mxu0
    %1987 = vmatpush.bf16.msra.mxu0 %v1251
    %1988 = vmatpush.bf16.msra.mxu0 %v1247
    %1989 = vmatpush.bf16.msra.mxu0 %v1243
    %1990 = vmatpush.bf16.msra.mxu0 %v1239
    %1991 = vmatpush.bf16.msra.mxu0 %v1235
    %1992 = vmatpush.bf16.msra.mxu0 %v1231
    %1993 = vmatpush.bf16.msra.mxu0 %v1227
    %1994 = vmatpush.bf16.msra.mxu0 %v1223
    %1995 = vmatmul.bf16.gmra.mxu0 %v85
    %v1996 = vpop.f32.mrf.mxu0
    %v1997 = vadd.f32 %v1984, %v1996
    %v1998 = vpop.f32.mrf.mxu0
    %1999 = vdwg.mxu0
    %2000 = vmatpush.bf16.msra.mxu0 %v1283
    %2001 = vmatpush.bf16.msra.mxu0 %v1279
    %2002 = vmatpush.bf16.msra.mxu0 %v1275
    %2003 = vmatpush.bf16.msra.mxu0 %v1271
    %2004 = vmatpush.bf16.msra.mxu0 %v1267
    %2005 = vmatpush.bf16.msra.mxu0 %v1263
    %2006 = vmatpush.bf16.msra.mxu0 %v1259
    %2007 = vmatpush.bf16.msra.mxu0 %v1255
    %2008 = vmatmul.bf16.gmra.mxu0 %v86
    %v2009 = vpop.f32.mrf.mxu0
    %v2010 = vadd.f32 %v1997, %v2009
    %v2011 = vpop.f32.mrf.mxu0
    %2012 = vdwg.mxu0
    %2013 = vmatpush.bf16.msra.mxu0 %v1315
    %2014 = vmatpush.bf16.msra.mxu0 %v1311
    %2015 = vmatpush.bf16.msra.mxu0 %v1307
    %2016 = vmatpush.bf16.msra.mxu0 %v1303
    %2017 = vmatpush.bf16.msra.mxu0 %v1299
    %2018 = vmatpush.bf16.msra.mxu0 %v1295
    %2019 = vmatpush.bf16.msra.mxu0 %v1291
    %2020 = vmatpush.bf16.msra.mxu0 %v1287
    %2021 = vmatmul.bf16.gmra.mxu0 %v87
    %v2022 = vpop.f32.mrf.mxu0
    %v2023 = vadd.f32 %v2010, %v2022
    %v2024 = vpop.f32.mrf.mxu0
    %2025 = vdwg.mxu0
    %2026 = vmatpush.bf16.msra.mxu0 %v1347
    %2027 = vmatpush.bf16.msra.mxu0 %v1343
    %2028 = vmatpush.bf16.msra.mxu0 %v1339
    %2029 = vmatpush.bf16.msra.mxu0 %v1335
    %2030 = vmatpush.bf16.msra.mxu0 %v1331
    %2031 = vmatpush.bf16.msra.mxu0 %v1327
    %2032 = vmatpush.bf16.msra.mxu0 %v1323
    %2033 = vmatpush.bf16.msra.mxu0 %v1319
    %2034 = vmatmul.bf16.gmra.mxu0 %v88
    %v2035 = vpop.f32.mrf.mxu0
    %v2036 = vadd.f32 %v2023, %v2035
    %v2037 = vpop.f32.mrf.mxu0
    %2038 = vdwg.mxu0
    %2039 = vmatpush.bf16.msra.mxu0 %v1379
    %2040 = vmatpush.bf16.msra.mxu0 %v1375
    %2041 = vmatpush.bf16.msra.mxu0 %v1371
    %2042 = vmatpush.bf16.msra.mxu0 %v1367
    %2043 = vmatpush.bf16.msra.mxu0 %v1363
    %2044 = vmatpush.bf16.msra.mxu0 %v1359
    %2045 = vmatpush.bf16.msra.mxu0 %v1355
    %2046 = vmatpush.bf16.msra.mxu0 %v1351
    %2047 = vmatmul.bf16.gmra.mxu0 %v89
    %v2048 = vpop.f32.mrf.mxu0
    %v2049 = vadd.f32 %v2036, %v2048
    %v2050 = vpop.f32.mrf.mxu0
    %2051 = vdwg.mxu0
    %vm2052 = vcmp.gt.f32.partialorder %v1737, 0.0
    %vm2053 = vcmp.gt.f32.partialorder %v1841, 0.0
    %vm2054 = vcmp.gt.f32.partialorder %v1945, 0.0
    %vm2055 = vcmp.gt.f32.partialorder %v2049, 0.0
    %v2056 = vmul.f32 %v1737, 0.2
    %v2057 = vmul.f32 %v1841, 0.2
    %v2058 = vmul.f32 %v1945, 0.2
    %v2059 = vmul.f32 %v2049, 0.2
    %v2060 = vsel %vm2052, %v1737, %v2056
    %v2061 = vsel %vm2053, %v1841, %v2057
    %v2062 = vsel %vm2054, %v1945, %v2058
    %v2063 = vsel %vm2055, %v2049, %v2059
    %v2064 = vpack.c.bf16 %v2060, %v2060
    %v2065 = vpack.c.bf16 %v2061, %v2061
    %v2066 = vpack.c.bf16 %v2062, %v2062
    %v2067 = vpack.c.bf16 %v2063, %v2063
    %v2068 = vld [vmem:[#allocation5] sm:$0xff]
    %v2069 = vld [vmem:[#allocation5 + $0x8] sm:$0xff]
    %v2070 = vld [vmem:[#allocation5 + $0x10] sm:$0xff]
    %v2071 = vld [vmem:[#allocation5 + $0x18] sm:$0xff]
    %v2072 = vld [vmem:[#allocation5 + $0x20] sm:$0xff]
    %v2073 = vld [vmem:[#allocation5 + $0x28] sm:$0xff]
    %v2074 = vld [vmem:[#allocation5 + $0x30] sm:$0xff]
    %v2075 = vld [vmem:[#allocation5 + $0x38] sm:$0xff]
    %v2076 = vld [vmem:[#allocation5 + $0x40] sm:$0xff]
    %v2077 = vld [vmem:[#allocation5 + $0x48] sm:$0xff]
    %v2078 = vld [vmem:[#allocation5 + $0x50] sm:$0xff]
    %v2079 = vld [vmem:[#allocation5 + $0x58] sm:$0xff]
    %v2080 = vld [vmem:[#allocation5 + $0x60] sm:$0xff]
    %v2081 = vld [vmem:[#allocation5 + $0x68] sm:$0xff]
    %v2082 = vld [vmem:[#allocation5 + $0x70] sm:$0xff]
    %v2083 = vld [vmem:[#allocation5 + $0x78] sm:$0xff]
    %v2084 = vld [vmem:[#allocation5 + $0x80] sm:$0xff]
    %v2085 = vld [vmem:[#allocation5 + $0x88] sm:$0xff]
    %v2086 = vld [vmem:[#allocation5 + $0x90] sm:$0xff]
    %v2087 = vld [vmem:[#allocation5 + $0x98] sm:$0xff]
    %v2088 = vld [vmem:[#allocation5 + $0xa0] sm:$0xff]
    %v2089 = vld [vmem:[#allocation5 + $0xa8] sm:$0xff]
    %v2090 = vld [vmem:[#allocation5 + $0xb0] sm:$0xff]
    %v2091 = vld [vmem:[#allocation5 + $0xb8] sm:$0xff]
    %v2092 = vld [vmem:[#allocation5 + $0xc0] sm:$0xff]
    %v2093 = vld [vmem:[#allocation5 + $0xc8] sm:$0xff]
    %v2094 = vld [vmem:[#allocation5 + $0xd0] sm:$0xff]
    %v2095 = vld [vmem:[#allocation5 + $0xd8] sm:$0xff]
    %v2096 = vld [vmem:[#allocation5 + $0xe0] sm:$0xff]
    %v2097 = vld [vmem:[#allocation5 + $0xe8] sm:$0xff]
    %v2098 = vld [vmem:[#allocation5 + $0xf0] sm:$0xff]
    %v2099 = vld [vmem:[#allocation5 + $0xf8] sm:$0xff]
    %v2100 = vld [vmem:[#allocation5 + $0x100] sm:$0xff]
    %v2101 = vld [vmem:[#allocation5 + $0x108] sm:$0xff]
    %v2102 = vld [vmem:[#allocation5 + $0x110] sm:$0xff]
    %v2103 = vld [vmem:[#allocation5 + $0x118] sm:$0xff]
    %v2104 = vld [vmem:[#allocation5 + $0x120] sm:$0xff]
    %v2105 = vld [vmem:[#allocation5 + $0x128] sm:$0xff]
    %v2106 = vld [vmem:[#allocation5 + $0x130] sm:$0xff]
    %v2107 = vld [vmem:[#allocation5 + $0x138] sm:$0xff]
    %v2108 = vld [vmem:[#allocation5 + $0x140] sm:$0xff]
    %v2109 = vld [vmem:[#allocation5 + $0x148] sm:$0xff]
    %v2110 = vld [vmem:[#allocation5 + $0x150] sm:$0xff]
    %v2111 = vld [vmem:[#allocation5 + $0x158] sm:$0xff]
    %v2112 = vld [vmem:[#allocation5 + $0x160] sm:$0xff]
    %v2113 = vld [vmem:[#allocation5 + $0x168] sm:$0xff]
    %v2114 = vld [vmem:[#allocation5 + $0x170] sm:$0xff]
    %v2115 = vld [vmem:[#allocation5 + $0x178] sm:$0xff]
    %v2116 = vld [vmem:[#allocation5 + $0x180] sm:$0xff]
    %v2117 = vld [vmem:[#allocation5 + $0x188] sm:$0xff]
    %v2118 = vld [vmem:[#allocation5 + $0x190] sm:$0xff]
    %v2119 = vld [vmem:[#allocation5 + $0x198] sm:$0xff]
    %v2120 = vld [vmem:[#allocation5 + $0x1a0] sm:$0xff]
    %v2121 = vld [vmem:[#allocation5 + $0x1a8] sm:$0xff]
    %v2122 = vld [vmem:[#allocation5 + $0x1b0] sm:$0xff]
    %v2123 = vld [vmem:[#allocation5 + $0x1b8] sm:$0xff]
    %v2124 = vld [vmem:[#allocation5 + $0x1c0] sm:$0xff]
    %v2125 = vld [vmem:[#allocation5 + $0x1c8] sm:$0xff]
    %v2126 = vld [vmem:[#allocation5 + $0x1d0] sm:$0xff]
    %v2127 = vld [vmem:[#allocation5 + $0x1d8] sm:$0xff]
    %v2128 = vld [vmem:[#allocation5 + $0x1e0] sm:$0xff]
    %v2129 = vld [vmem:[#allocation5 + $0x1e8] sm:$0xff]
    %v2130 = vld [vmem:[#allocation5 + $0x1f0] sm:$0xff]
    %v2131 = vld [vmem:[#allocation5 + $0x1f8] sm:$0xff]
    %v2132 = vld [vmem:[%s4] sm:$0x3]
    %v2134 = vperm.slane %v2132, 0
    %v2135 = vperm.slane %v2132, 1
    %v2202 = vunpack.c.l.b16 %v2068
    %v2203 = vunpack.c.h.b16 %v2068
    %v2204 = vunpack.c.l.b16 %v2069
    %v2205 = vunpack.c.h.b16 %v2069
    %v2206 = vunpack.c.l.b16 %v2070
    %v2207 = vunpack.c.h.b16 %v2070
    %v2208 = vunpack.c.l.b16 %v2071
    %v2209 = vunpack.c.h.b16 %v2071
    %v2210 = vunpack.c.l.b16 %v2072
    %v2211 = vunpack.c.h.b16 %v2072
    %v2212 = vunpack.c.l.b16 %v2073
    %v2213 = vunpack.c.h.b16 %v2073
    %v2214 = vunpack.c.l.b16 %v2074
    %v2215 = vunpack.c.h.b16 %v2074
    %v2216 = vunpack.c.l.b16 %v2075
    %v2217 = vunpack.c.h.b16 %v2075
    %v2218 = vunpack.c.l.b16 %v2076
    %v2219 = vunpack.c.h.b16 %v2076
    %v2220 = vunpack.c.l.b16 %v2077
    %v2221 = vunpack.c.h.b16 %v2077
    %v2222 = vunpack.c.l.b16 %v2078
    %v2223 = vunpack.c.h.b16 %v2078
    %v2224 = vunpack.c.l.b16 %v2079
    %v2225 = vunpack.c.h.b16 %v2079
    %v2226 = vunpack.c.l.b16 %v2080
    %v2227 = vunpack.c.h.b16 %v2080
    %v2228 = vunpack.c.l.b16 %v2081
    %v2229 = vunpack.c.h.b16 %v2081
    %v2230 = vunpack.c.l.b16 %v2082
    %v2231 = vunpack.c.h.b16 %v2082
    %v2232 = vunpack.c.l.b16 %v2083
    %v2233 = vunpack.c.h.b16 %v2083
    %v2234 = vunpack.c.l.b16 %v2084
    %v2235 = vunpack.c.h.b16 %v2084
    %v2236 = vunpack.c.l.b16 %v2085
    %v2237 = vunpack.c.h.b16 %v2085
    %v2238 = vunpack.c.l.b16 %v2086
    %v2239 = vunpack.c.h.b16 %v2086
    %v2240 = vunpack.c.l.b16 %v2087
    %v2241 = vunpack.c.h.b16 %v2087
    %v2242 = vunpack.c.l.b16 %v2088
    %v2243 = vunpack.c.h.b16 %v2088
    %v2244 = vunpack.c.l.b16 %v2089
    %v2245 = vunpack.c.h.b16 %v2089
    %v2246 = vunpack.c.l.b16 %v2090
    %v2247 = vunpack.c.h.b16 %v2090
    %v2248 = vunpack.c.l.b16 %v2091
    %v2249 = vunpack.c.h.b16 %v2091
    %v2250 = vunpack.c.l.b16 %v2092
    %v2251 = vunpack.c.h.b16 %v2092
    %v2252 = vunpack.c.l.b16 %v2093
    %v2253 = vunpack.c.h.b16 %v2093
    %v2254 = vunpack.c.l.b16 %v2094
    %v2255 = vunpack.c.h.b16 %v2094
    %v2256 = vunpack.c.l.b16 %v2095
    %v2257 = vunpack.c.h.b16 %v2095
    %v2258 = vunpack.c.l.b16 %v2096
    %v2259 = vunpack.c.h.b16 %v2096
    %v2260 = vunpack.c.l.b16 %v2097
    %v2261 = vunpack.c.h.b16 %v2097
    %v2262 = vunpack.c.l.b16 %v2098
    %v2263 = vunpack.c.h.b16 %v2098
    %v2264 = vunpack.c.l.b16 %v2099
    %v2265 = vunpack.c.h.b16 %v2099
    %v2266 = vunpack.c.l.b16 %v2100
    %v2267 = vunpack.c.h.b16 %v2100
    %v2268 = vunpack.c.l.b16 %v2101
    %v2269 = vunpack.c.h.b16 %v2101
    %v2270 = vunpack.c.l.b16 %v2102
    %v2271 = vunpack.c.h.b16 %v2102
    %v2272 = vunpack.c.l.b16 %v2103
    %v2273 = vunpack.c.h.b16 %v2103
    %v2274 = vunpack.c.l.b16 %v2104
    %v2275 = vunpack.c.h.b16 %v2104
    %v2276 = vunpack.c.l.b16 %v2105
    %v2277 = vunpack.c.h.b16 %v2105
    %v2278 = vunpack.c.l.b16 %v2106
    %v2279 = vunpack.c.h.b16 %v2106
    %v2280 = vunpack.c.l.b16 %v2107
    %v2281 = vunpack.c.h.b16 %v2107
    %v2282 = vunpack.c.l.b16 %v2108
    %v2283 = vunpack.c.h.b16 %v2108
    %v2284 = vunpack.c.l.b16 %v2109
    %v2285 = vunpack.c.h.b16 %v2109
    %v2286 = vunpack.c.l.b16 %v2110
    %v2287 = vunpack.c.h.b16 %v2110
    %v2288 = vunpack.c.l.b16 %v2111
    %v2289 = vunpack.c.h.b16 %v2111
    %v2290 = vunpack.c.l.b16 %v2112
    %v2291 = vunpack.c.h.b16 %v2112
    %v2292 = vunpack.c.l.b16 %v2113
    %v2293 = vunpack.c.h.b16 %v2113
    %v2294 = vunpack.c.l.b16 %v2114
    %v2295 = vunpack.c.h.b16 %v2114
    %v2296 = vunpack.c.l.b16 %v2115
    %v2297 = vunpack.c.h.b16 %v2115
    %v2298 = vunpack.c.l.b16 %v2116
    %v2299 = vunpack.c.h.b16 %v2116
    %v2300 = vunpack.c.l.b16 %v2117
    %v2301 = vunpack.c.h.b16 %v2117
    %v2302 = vunpack.c.l.b16 %v2118
    %v2303 = vunpack.c.h.b16 %v2118
    %v2304 = vunpack.c.l.b16 %v2119
    %v2305 = vunpack.c.h.b16 %v2119
    %v2306 = vunpack.c.l.b16 %v2120
    %v2307 = vunpack.c.h.b16 %v2120
    %v2308 = vunpack.c.l.b16 %v2121
    %v2309 = vunpack.c.h.b16 %v2121
    %v2310 = vunpack.c.l.b16 %v2122
    %v2311 = vunpack.c.h.b16 %v2122
    %v2312 = vunpack.c.l.b16 %v2123
    %v2313 = vunpack.c.h.b16 %v2123
    %v2314 = vunpack.c.l.b16 %v2124
    %v2315 = vunpack.c.h.b16 %v2124
    %v2316 = vunpack.c.l.b16 %v2125
    %v2317 = vunpack.c.h.b16 %v2125
    %v2318 = vunpack.c.l.b16 %v2126
    %v2319 = vunpack.c.h.b16 %v2126
    %v2320 = vunpack.c.l.b16 %v2127
    %v2321 = vunpack.c.h.b16 %v2127
    %v2322 = vunpack.c.l.b16 %v2128
    %v2323 = vunpack.c.h.b16 %v2128
    %v2324 = vunpack.c.l.b16 %v2129
    %v2325 = vunpack.c.h.b16 %v2129
    %v2326 = vunpack.c.l.b16 %v2130
    %v2327 = vunpack.c.h.b16 %v2130
    %v2328 = vunpack.c.l.b16 %v2131
    %v2329 = vunpack.c.h.b16 %v2131
    %v2330 = vpack.c.b16 %v2204, %v2202
    %v2331 = vpack.c.b16 %v2205, %v2203
    %v2332 = vpack.c.b16 %v2208, %v2206
    %v2333 = vpack.c.b16 %v2209, %v2207
    %v2334 = vpack.c.b16 %v2212, %v2210
    %v2335 = vpack.c.b16 %v2213, %v2211
    %v2336 = vpack.c.b16 %v2216, %v2214
    %v2337 = vpack.c.b16 %v2217, %v2215
    %v2338 = vpack.c.b16 %v2220, %v2218
    %v2339 = vpack.c.b16 %v2221, %v2219
    %v2340 = vpack.c.b16 %v2224, %v2222
    %v2341 = vpack.c.b16 %v2225, %v2223
    %v2342 = vpack.c.b16 %v2228, %v2226
    %v2343 = vpack.c.b16 %v2229, %v2227
    %v2344 = vpack.c.b16 %v2232, %v2230
    %v2345 = vpack.c.b16 %v2233, %v2231
    %v2346 = vpack.c.b16 %v2236, %v2234
    %v2347 = vpack.c.b16 %v2237, %v2235
    %v2348 = vpack.c.b16 %v2240, %v2238
    %v2349 = vpack.c.b16 %v2241, %v2239
    %v2350 = vpack.c.b16 %v2244, %v2242
    %v2351 = vpack.c.b16 %v2245, %v2243
    %v2352 = vpack.c.b16 %v2248, %v2246
    %v2353 = vpack.c.b16 %v2249, %v2247
    %v2354 = vpack.c.b16 %v2252, %v2250
    %v2355 = vpack.c.b16 %v2253, %v2251
    %v2356 = vpack.c.b16 %v2256, %v2254
    %v2357 = vpack.c.b16 %v2257, %v2255
    %v2358 = vpack.c.b16 %v2260, %v2258
    %v2359 = vpack.c.b16 %v2261, %v2259
    %v2360 = vpack.c.b16 %v2264, %v2262
    %v2361 = vpack.c.b16 %v2265, %v2263
    %v2362 = vpack.c.b16 %v2268, %v2266
    %v2363 = vpack.c.b16 %v2269, %v2267
    %v2364 = vpack.c.b16 %v2272, %v2270
    %v2365 = vpack.c.b16 %v2273, %v2271
    %v2366 = vpack.c.b16 %v2276, %v2274
    %v2367 = vpack.c.b16 %v2277, %v2275
    %v2368 = vpack.c.b16 %v2280, %v2278
    %v2369 = vpack.c.b16 %v2281, %v2279
    %v2370 = vpack.c.b16 %v2284, %v2282
    %v2371 = vpack.c.b16 %v2285, %v2283
    %v2372 = vpack.c.b16 %v2288, %v2286
    %v2373 = vpack.c.b16 %v2289, %v2287
    %v2374 = vpack.c.b16 %v2292, %v2290
    %v2375 = vpack.c.b16 %v2293, %v2291
    %v2376 = vpack.c.b16 %v2296, %v2294
    %v2377 = vpack.c.b16 %v2297, %v2295
    %v2378 = vpack.c.b16 %v2300, %v2298
    %v2379 = vpack.c.b16 %v2301, %v2299
    %v2380 = vpack.c.b16 %v2304, %v2302
    %v2381 = vpack.c.b16 %v2305, %v2303
    %v2382 = vpack.c.b16 %v2308, %v2306
    %v2383 = vpack.c.b16 %v2309, %v2307
    %v2384 = vpack.c.b16 %v2312, %v2310
    %v2385 = vpack.c.b16 %v2313, %v2311
    %v2386 = vpack.c.b16 %v2316, %v2314
    %v2387 = vpack.c.b16 %v2317, %v2315
    %v2388 = vpack.c.b16 %v2320, %v2318
    %v2389 = vpack.c.b16 %v2321, %v2319
    %v2390 = vpack.c.b16 %v2324, %v2322
    %v2391 = vpack.c.b16 %v2325, %v2323
    %v2392 = vpack.c.b16 %v2328, %v2326
    %v2393 = vpack.c.b16 %v2329, %v2327
    %2458 = vmatpush.bf16.msra.mxu0 %v2344
    %2459 = vmatpush.bf16.msra.mxu0 %v2342
    %2460 = vmatpush.bf16.msra.mxu0 %v2340
    %2461 = vmatpush.bf16.msra.mxu0 %v2338
    %2462 = vmatpush.bf16.msra.mxu0 %v2336
    %2463 = vmatpush.bf16.msra.mxu0 %v2334
    %2464 = vmatpush.bf16.msra.mxu0 %v2332
    %2465 = vmatpush.bf16.msra.mxu0 %v2330
    %2466 = vmatmul.bf16.gmra.mxu0 %v2064
    %v2467 = vpop.f32.mrf.mxu0
    %v2468 = vadd.f32 %v2134, %v2467
    %v2469 = vpop.f32.mrf.mxu0
    %2470 = vdwg.mxu0
    %2471 = vmatpush.bf16.msra.mxu0 %v2360
    %2472 = vmatpush.bf16.msra.mxu0 %v2358
    %2473 = vmatpush.bf16.msra.mxu0 %v2356
    %2474 = vmatpush.bf16.msra.mxu0 %v2354
    %2475 = vmatpush.bf16.msra.mxu0 %v2352
    %2476 = vmatpush.bf16.msra.mxu0 %v2350
    %2477 = vmatpush.bf16.msra.mxu0 %v2348
    %2478 = vmatpush.bf16.msra.mxu0 %v2346
    %2479 = vmatmul.bf16.gmra.mxu0 %v2065
    %v2480 = vpop.f32.mrf.mxu0
    %v2481 = vadd.f32 %v2468, %v2480
    %v2482 = vpop.f32.mrf.mxu0
    %2483 = vdwg.mxu0
    %2484 = vmatpush.bf16.msra.mxu0 %v2376
    %2485 = vmatpush.bf16.msra.mxu0 %v2374
    %2486 = vmatpush.bf16.msra.mxu0 %v2372
    %2487 = vmatpush.bf16.msra.mxu0 %v2370
    %2488 = vmatpush.bf16.msra.mxu0 %v2368
    %2489 = vmatpush.bf16.msra.mxu0 %v2366
    %2490 = vmatpush.bf16.msra.mxu0 %v2364
    %2491 = vmatpush.bf16.msra.mxu0 %v2362
    %2492 = vmatmul.bf16.gmra.mxu0 %v2066
    %v2493 = vpop.f32.mrf.mxu0
    %v2494 = vadd.f32 %v2481, %v2493
    %v2495 = vpop.f32.mrf.mxu0
    %2496 = vdwg.mxu0
    %2497 = vmatpush.bf16.msra.mxu0 %v2392
    %2498 = vmatpush.bf16.msra.mxu0 %v2390
    %2499 = vmatpush.bf16.msra.mxu0 %v2388
    %2500 = vmatpush.bf16.msra.mxu0 %v2386
    %2501 = vmatpush.bf16.msra.mxu0 %v2384
    %2502 = vmatpush.bf16.msra.mxu0 %v2382
    %2503 = vmatpush.bf16.msra.mxu0 %v2380
    %2504 = vmatpush.bf16.msra.mxu0 %v2378
    %2505 = vmatmul.bf16.gmra.mxu0 %v2067
    %v2506 = vpop.f32.mrf.mxu0
    %v2507 = vadd.f32 %v2494, %v2506
    %v2508 = vpop.f32.mrf.mxu0
    %2509 = vdwg.mxu0
    %2510 = vmatpush.bf16.msra.mxu0 %v2345
    %2511 = vmatpush.bf16.msra.mxu0 %v2343
    %2512 = vmatpush.bf16.msra.mxu0 %v2341
    %2513 = vmatpush.bf16.msra.mxu0 %v2339
    %2514 = vmatpush.bf16.msra.mxu0 %v2337
    %2515 = vmatpush.bf16.msra.mxu0 %v2335
    %2516 = vmatpush.bf16.msra.mxu0 %v2333
    %2517 = vmatpush.bf16.msra.mxu0 %v2331
    %2518 = vmatmul.bf16.gmra.mxu0 %v2064
    %v2519 = vpop.f32.mrf.mxu0
    %v2520 = vadd.f32 %v2135, %v2519
    %v2521 = vpop.f32.mrf.mxu0
    %2522 = vdwg.mxu0
    %2523 = vmatpush.bf16.msra.mxu0 %v2361
    %2524 = vmatpush.bf16.msra.mxu0 %v2359
    %2525 = vmatpush.bf16.msra.mxu0 %v2357
    %2526 = vmatpush.bf16.msra.mxu0 %v2355
    %2527 = vmatpush.bf16.msra.mxu0 %v2353
    %2528 = vmatpush.bf16.msra.mxu0 %v2351
    %2529 = vmatpush.bf16.msra.mxu0 %v2349
    %2530 = vmatpush.bf16.msra.mxu0 %v2347
    %2531 = vmatmul.bf16.gmra.mxu0 %v2065
    %v2532 = vpop.f32.mrf.mxu0
    %v2533 = vadd.f32 %v2520, %v2532
    %v2534 = vpop.f32.mrf.mxu0
    %2535 = vdwg.mxu0
    %2536 = vmatpush.bf16.msra.mxu0 %v2377
    %2537 = vmatpush.bf16.msra.mxu0 %v2375
    %2538 = vmatpush.bf16.msra.mxu0 %v2373
    %2539 = vmatpush.bf16.msra.mxu0 %v2371
    %2540 = vmatpush.bf16.msra.mxu0 %v2369
    %2541 = vmatpush.bf16.msra.mxu0 %v2367
    %2542 = vmatpush.bf16.msra.mxu0 %v2365
    %2543 = vmatpush.bf16.msra.mxu0 %v2363
    %2544 = vmatmul.bf16.gmra.mxu0 %v2066
    %v2545 = vpop.f32.mrf.mxu0
    %v2546 = vadd.f32 %v2533, %v2545
    %v2547 = vpop.f32.mrf.mxu0
    %2548 = vdwg.mxu0
    %2549 = vmatpush.bf16.msra.mxu0 %v2393
    %2550 = vmatpush.bf16.msra.mxu0 %v2391
    %2551 = vmatpush.bf16.msra.mxu0 %v2389
    %2552 = vmatpush.bf16.msra.mxu0 %v2387
    %2553 = vmatpush.bf16.msra.mxu0 %v2385
    %2554 = vmatpush.bf16.msra.mxu0 %v2383
    %2555 = vmatpush.bf16.msra.mxu0 %v2381
    %2556 = vmatpush.bf16.msra.mxu0 %v2379
    %2557 = vmatmul.bf16.gmra.mxu0 %v2067
    %v2558 = vpop.f32.mrf.mxu0
    %v2559 = vadd.f32 %v2546, %v2558
    %v2560 = vpop.f32.mrf.mxu0
    %2561 = vdwg.mxu0
    %vm2562 = vcmp.gt.f32.partialorder %v2507, 0.0
    %vm2563 = vcmp.gt.f32.partialorder %v2559, 0.0
    %v2564 = vmul.f32 %v2507, 0.2
    %v2565 = vmul.f32 %v2559, 0.2
    %v2566 = vsel %vm2562, %v2507, %v2564
    %v2567 = vsel %vm2563, %v2559, %v2565
    %v2568 = vld [vmem:[%s5] sm:$0x3]
    %v2570 = vperm.slane %v2568, 0
    %v2571 = vperm.slane %v2568, 1
    %v2574 = vmul.f32 %v2566, %v2570
    %v2575 = vmul.f32 %v2567, %v2571
    %vm2576 = vcmask 1041408
    %v2577 = vsel %vm2576, %v2574, 0.0
    %v2578 = vsel %vm2576, %v2575, 0.0
    %v2579 = vadd.f32 %v2577, %v2578
    %2580 = vadd.xlane.f32.xlu0 %v2579
    %v2581 = vpop.xlane.xlu0 %2580
    %s2582 = sld [smem:[#allocation2]]
    %v2583 = vstv %s2582
    %v2584 = vadd.f32 %v2581, %v2583
    %vm2585 = vcmask 1024
    %2586 = vst.msk [vmem:[%s7] sm:$0x3] %vm2585, %v2584
    // Predicated region
    $region38: #{discriminator_forward.1} parent=1 // pred_check
      _
    $region39: #{discriminator_forward.1} parent=1 // pred_check_branch
      %2588 = sbr.rel (0) target = $region41
    $region40: #{discriminator_forward.1} parent=1 // pred_region
      _
    $region41: #{discriminator_forward.1} parent=1 // pred_fallthru
      _
    // Predicated region
    $region42: #{discriminator_forward.1} parent=1 // pred_check
      _
    $region43: #{discriminator_forward.1} parent=1 // pred_check_branch
      %2590 = sbr.rel (0) target = $region45
    $region44: #{discriminator_forward.1} parent=1 // pred_region
      _
    $region45: #{discriminator_forward.1} parent=1 // pred_fallthru
      _
    %2591 = vsyncpa [#allocation4], 1
    %2592 = vsyncpa [#allocation6], 1

</llo_original>
